<compile_context>
chip_gen: v7x
topology: tpu7x:2x2x1
jax: 0.10.0
libtpu: 0.0.40
codegen_flags: <defaults>
</compile_context>

<pallas_src>
import functools

import jax
import jax.numpy as jnp
from jax.experimental import pallas as pl
from jax.experimental.pallas import tpu as pltpu


# ----------------------------- kernel --------------------------------------


def _apply_gates(gates, c, H):
    """PyTorch LSTM gate order [i, f, g, o]. gates:(B,4H) c:(B,H)."""
    i = jax.nn.sigmoid(gates[:, 0 * H:1 * H])
    f = jax.nn.sigmoid(gates[:, 1 * H:2 * H])
    g = jnp.tanh(gates[:, 2 * H:3 * H])
    o = jax.nn.sigmoid(gates[:, 3 * H:4 * H])
    c_new = f * c + i * g
    h_new = o * jnp.tanh(c_new)
    return h_new, c_new


def seq2seq_kernel(x_ref, trg_ref,
                   wih_e_ref, whh_e_ref, b_e_ref,
                   wih_d_ref, whh_d_ref, b_d_ref,
                   wout_ref, bout_ref,
                   out_ref, *, batch, is_train):
    """Single-invocation fused encoder + decoder + linear head.

    x_ref:   (T*B, D1)   encoder inputs (time-major, batch flattened)
    trg_ref: (Td*B, D2)  decoder teacher-forcing inputs
    w*_ref:  pre-transposed weights, biases pre-combined (b_ih + b_hh)
    out_ref: (Td*B, O)   predictions
    """
    B = batch
    T = x_ref.shape[0] // B
    Td = trg_ref.shape[0] // B
    H = whh_e_ref.shape[0]

    # ---------------- encoder ----------------
    # Hoisted input projection: one (T*B, D1) @ (D1, 4H) matmul for the whole
    # sequence; only h @ Whh stays on the serial critical path.
    x_proj = (jnp.dot(x_ref[...], wih_e_ref[...],
                      preferred_element_type=jnp.float32) + b_e_ref[...])
    whh_e = whh_e_ref[...]

    h = jnp.zeros((B, H), jnp.float32)
    c = jnp.zeros((B, H), jnp.float32)
    for t in range(T):                      # static, fully unrolled
        gates = x_proj[t * B:(t + 1) * B, :] + jnp.dot(
            h, whh_e, preferred_element_type=jnp.float32)
        h, c = _apply_gates(gates, c, H)

    # ---------------- decoder + output head ----------------
    whh_d = whh_d_ref[...]
    b_d = b_d_ref[...]
    wout = wout_ref[...]
    bout = bout_ref[...]

    preds = []
    if is_train:
        # Teacher forcing: hoist trg @ Wih_d over all steps into one matmul.
        trg_proj = jnp.dot(trg_ref[...], wih_d_ref[...],
                           preferred_element_type=jnp.float32)
        for t in range(Td):
            gates = jnp.dot(h, whh_d, preferred_element_type=jnp.float32) + b_d
            if t > 0:                       # t == 0 uses a zero decoder input
                gates = gates + trg_proj[t * B:(t + 1) * B, :]
            h, c = _apply_gates(gates, c, H)
            preds.append(
                jnp.dot(h, wout, preferred_element_type=jnp.float32) + bout)
    else:
        # Free running: the step-t decoder input is pred_{t-1} = h_{t-1}@Wout+b,
        # so its input projection folds into the recurrent weight exactly:
        #   gates_t = h_{t-1} @ (Whh^T + Wout^T @ Wih^T) + (b_d + b_out @ Wih^T)
        wih_d = wih_d_ref[...]
        w_comb = whh_d + jnp.dot(wout, wih_d,
                                 preferred_element_type=jnp.float32)
        b_comb = b_d + jnp.dot(bout, wih_d,
                               preferred_element_type=jnp.float32)
        for t in range(Td):
            if t == 0:                      # zero decoder input at step 0
                gates = jnp.dot(h, whh_d,
                                preferred_element_type=jnp.float32) + b_d
            else:
                gates = jnp.dot(h, w_comb,
                                preferred_element_type=jnp.float32) + b_comb
            h, c = _apply_gates(gates, c, H)
            preds.append(
                jnp.dot(h, wout, preferred_element_type=jnp.float32) + bout)

    # Single flush of all predictions at the very end.
    out_ref[...] = jnp.concatenate(preds, axis=0)


# ----------------------------- wrapper --------------------------------------


@functools.partial(jax.jit, static_argnames=("is_train",))
def seq2seq_forward(params, x, trg, is_train):
    """Full forward pass. x: (T_enc, B, F) with x[...,-2]=week idx,
    x[...,-1]=hour idx. trg: (T_dec, B, D2). Returns (T_dec, B, O)."""
    # glue: tiny embedding gathers + concat (indexing only, no hot compute)
    hour_idx = x[:, :, -1].astype(jnp.int32)
    week_idx = x[:, :, -2].astype(jnp.int32)
    x_input = jnp.concatenate(
        [params["emb_hour"][hour_idx], params["emb_week"][week_idx],
         x[:, :, :-2]], axis=2)

    T, B, D1 = x_input.shape
    Td, _, D2 = trg.shape
    H = params["w_hh_e"].shape[1]
    O = params["w_out"].shape[0]

    # Pad batch to a sublane multiple (8) so per-step row slices of the
    # hoisted projections are aligned; padded rows are independent garbage.
    BP = max(8, ((B + 7) // 8) * 8)
    if BP != B:
        x_input = jnp.pad(x_input, ((0, 0), (0, BP - B), (0, 0)))
        trg_p = jnp.pad(trg, ((0, 0), (0, BP - B), (0, 0)))
    else:
        trg_p = trg
    x_flat = x_input.reshape(T * BP, D1)
    trg_flat = trg_p.reshape(Td * BP, D2)

    # kernel-layout weights: pre-transposed, biases combined
    wih_e = params["w_ih_e"].T                           # (D1, 4H)
    whh_e = params["w_hh_e"].T                           # (H , 4H)
    b_e = (params["b_ih_e"] + params["b_hh_e"])[None, :]
    wih_d = params["w_ih_d"].T                           # (D2, 4H)
    whh_d = params["w_hh_d"].T                           # (H , 4H)
    b_d = (params["b_ih_d"] + params["b_hh_d"])[None, :]
    wout = params["w_out"].T                             # (H, O)
    bout = params["b_out"][None, :]                      # (1, O)

    if not is_train:
        # free-running decoder feeds its O-dim prediction back as a D2-dim input
        assert D2 == O, "inference feedback requires decoder input dim == output dim"

    vmem = lambda: pl.BlockSpec(memory_space=pltpu.MemorySpace.VMEM)
    kernel = functools.partial(seq2seq_kernel, batch=BP, is_train=is_train)
    out_flat = pl.pallas_call(
        kernel,
        out_shape=jax.ShapeDtypeStruct((Td * BP, O), jnp.float32),
        in_specs=[vmem() for _ in range(10)],
        out_specs=vmem(),
    )(x_flat, trg_flat, wih_e, whh_e, b_e, wih_d, whh_d, b_d, wout, bout)

    return out_flat.reshape(Td, BP, O)[:, :B, :]


# --------------------------- pure-JAX reference -----------------------------


def _lstm_cell_ref(x_t, h, c, wih, whh, bih, bhh):
    H = h.shape[-1]
    gates = x_t @ wih.T + bih + h @ whh.T + bhh
    i = jax.nn.sigmoid(gates[:, :H])
    f = jax.nn.sigmoid(gates[:, H:2 * H])
    g = jnp.tanh(gates[:, 2 * H:3 * H])
    o = jax.nn.sigmoid(gates[:, 3 * H:])
    c = f * c + i * g
    h = o * jnp.tanh(c)
    return h, c


def seq2seq_forward_ref(params, x, trg, is_train):
    hour_idx = x[:, :, -1].astype(jnp.int32)
    week_idx = x[:, :, -2].astype(jnp.int32)
    x_input = jnp.concatenate(
        [params["emb_hour"][hour_idx], params["emb_week"][week_idx],
         x[:, :, :-2]], axis=2)
    T, B, _ = x_input.shape
    H = params["w_hh_e"].shape[1]
    h = jnp.zeros((B, H), jnp.float32)
    c = jnp.zeros((B, H), jnp.float32)
    for t in range(T):
        h, c = _lstm_cell_ref(x_input[t], h, c, params["w_ih_e"],
                              params["w_hh_e"], params["b_ih_e"],
                              params["b_hh_e"])
    Td = trg.shape[0]
    outs = []
    pred = jnp.zeros_like(trg[0])
    for t in range(Td):
        if t == 0:
            dec_in = jnp.zeros_like(trg[0])
        else:
            dec_in = trg[t] if is_train else pred
        h, c = _lstm_cell_ref(dec_in, h, c, params["w_ih_d"],
                              params["w_hh_d"], params["b_ih_d"],
                              params["b_hh_d"])
        pred = h @ params["w_out"].T + params["b_out"]
        outs.append(pred)
    return jnp.stack(outs, axis=0)


# --------------------------------- main -------------------------------------


if __name__ == "__main__":
    # model sizes implied by the forward: input_dim2 = 2, output_dim = 2
    input_dim1 = 4      # two continuous features + week + hour
    input_dim2 = 2
    hid_dim = 32
    output_dim = 2
    enc_len, dec_len, batch = 8, 6, 4

    key = jax.random.PRNGKey(0)
    ks = jax.random.split(key, 16)
    u = 1.0 / jnp.sqrt(hid_dim)

    def uni(k, shape):
        return jax.random.uniform(k, shape, jnp.float32, -u, u)

    params = {
        "emb_hour": jax.random.normal(ks[0], (24, 1), jnp.float32),
        "emb_week": jax.random.normal(ks[1], (7, 1), jnp.float32),
        "w_ih_e": uni(ks[2], (4 * hid_dim, input_dim1)),
        "w_hh_e": uni(ks[3], (4 * hid_dim, hid_dim)),
        "b_ih_e": uni(ks[4], (4 * hid_dim,)),
        "b_hh_e": uni(ks[5], (4 * hid_dim,)),
        "w_ih_d": uni(ks[6], (4 * hid_dim, input_dim2)),
        "w_hh_d": uni(ks[7], (4 * hid_dim, hid_dim)),
        "b_ih_d": uni(ks[8], (4 * hid_dim,)),
        "b_hh_d": uni(ks[9], (4 * hid_dim,)),
        "w_out": uni(ks[10], (output_dim, hid_dim)),
        "b_out": uni(ks[11], (output_dim,)),
    }

    # encoder input: (T, B, F) with [:, :, -2] = week idx, [:, :, -1] = hour idx
    cont = jax.random.normal(ks[12], (enc_len, batch, input_dim1 - 2),
                             jnp.float32)
    week = jax.random.randint(ks[13], (enc_len, batch, 1), 0, 7).astype(
        jnp.float32)
    hour = jax.random.randint(ks[14], (enc_len, batch, 1), 0, 24).astype(
        jnp.float32)
    x = jnp.concatenate([cont, week, hour], axis=2)
    trg = jax.random.normal(ks[15], (dec_len, batch, input_dim2), jnp.float32)

    for is_train in (True, False):
        out = seq2seq_forward(params, x, trg, is_train=is_train)
        out = jax.block_until_ready(out)
        ref = seq2seq_forward_ref(params, x, trg, is_train)
        assert out.shape == (dec_len, batch, output_dim)
        assert jnp.max(jnp.abs(out - ref)) < 1e-3, "mismatch vs reference"

    print("KERNEL_OK")
</pallas_src>

<mosaic_0001>
module attributes {stable_mosaic.version = 11 : i64} {
  func.func @seq2seq_kernel(%arg0: memref<64x4xf32, #tpu.memory_space<vmem>>, %arg1: memref<48x2xf32, #tpu.memory_space<vmem>>, %arg2: memref<4x128xf32, #tpu.memory_space<vmem>>, %arg3: memref<32x128xf32, #tpu.memory_space<vmem>>, %arg4: memref<1x128xf32, #tpu.memory_space<vmem>>, %arg5: memref<2x128xf32, #tpu.memory_space<vmem>>, %arg6: memref<32x128xf32, #tpu.memory_space<vmem>>, %arg7: memref<1x128xf32, #tpu.memory_space<vmem>>, %arg8: memref<32x2xf32, #tpu.memory_space<vmem>>, %arg9: memref<1x2xf32, #tpu.memory_space<vmem>>, %arg10: memref<48x2xf32, #tpu.memory_space<vmem>>) attributes {dimension_semantics = [], scalar_prefetch = 0 : i64, scratch_operands = 0 : i64, tpu.core_type = #tpu.core_type<tc>} {
    %c0 = arith.constant 0 : index
    %c0_0 = arith.constant 0 : index
    %0 = vector.load %arg0[%c0, %c0_0] : memref<64x4xf32, #tpu.memory_space<vmem>>, vector<64x4xf32>
    %c0_1 = arith.constant 0 : index
    %c0_2 = arith.constant 0 : index
    %1 = vector.load %arg2[%c0_1, %c0_2] : memref<4x128xf32, #tpu.memory_space<vmem>>, vector<4x128xf32>
    %cst = arith.constant dense<0.000000e+00> : vector<64x128xf32>
    %2 = tpu.matmul %0, %1, %cst {dimension_numbers = #tpu.dot_dimension_numbers<[1], [0], [0], [1], [0, 0, 1, 1], [], []>} : vector<64x4xf32>, vector<4x128xf32>, vector<64x128xf32> -> vector<64x128xf32>
    %c0_3 = arith.constant 0 : index
    %c0_4 = arith.constant 0 : index
    %3 = vector.load %arg4[%c0_3, %c0_4] : memref<1x128xf32, #tpu.memory_space<vmem>>, vector<1x128xf32>
    %4 = vector.broadcast %3 : vector<1x128xf32> to vector<64x128xf32>
    %5 = arith.addf %2, %4 : vector<64x128xf32>
    %c0_5 = arith.constant 0 : index
    %c0_6 = arith.constant 0 : index
    %6 = vector.load %arg3[%c0_5, %c0_6] : memref<32x128xf32, #tpu.memory_space<vmem>>, vector<32x128xf32>
    %cst_7 = arith.constant 0.000000e+00 : f32
    %7 = vector.broadcast %cst_7 : f32 to vector<8x32xf32>
    %cst_8 = arith.constant 0.000000e+00 : f32
    %8 = vector.broadcast %cst_8 : f32 to vector<8x32xf32>
    %9 = vector.extract_strided_slice %5 {offsets = [0, 0], sizes = [8, 128], strides = [1, 1]} : vector<64x128xf32> to vector<8x128xf32>
    %cst_9 = arith.constant dense<0.000000e+00> : vector<8x128xf32>
    %10 = tpu.matmul %7, %6, %cst_9 {dimension_numbers = #tpu.dot_dimension_numbers<[1], [0], [0], [1], [0, 0, 1, 1], [], []>} : vector<8x32xf32>, vector<32x128xf32>, vector<8x128xf32> -> vector<8x128xf32>
    %11 = arith.addf %9, %10 : vector<8x128xf32>
    %12 = vector.extract_strided_slice %11 {offsets = [0, 0], sizes = [8, 32], strides = [1, 1]} : vector<8x128xf32> to vector<8x32xf32>
    %13 = arith.negf %12 : vector<8x32xf32>
    %14 = math.exp %13 : vector<8x32xf32>
    %cst_10 = arith.constant 1.000000e+00 : f32
    %15 = vector.broadcast %cst_10 : f32 to vector<8x32xf32>
    %16 = arith.addf %15, %14 : vector<8x32xf32>
    %17 = arith.divf %15, %16 : vector<8x32xf32>
    %18 = vector.extract_strided_slice %11 {offsets = [0, 32], sizes = [8, 32], strides = [1, 1]} : vector<8x128xf32> to vector<8x32xf32>
    %19 = arith.negf %18 : vector<8x32xf32>
    %20 = math.exp %19 : vector<8x32xf32>
    %cst_11 = arith.constant 1.000000e+00 : f32
    %21 = vector.broadcast %cst_11 : f32 to vector<8x32xf32>
    %22 = arith.addf %21, %20 : vector<8x32xf32>
    %23 = arith.divf %21, %22 : vector<8x32xf32>
    %24 = vector.extract_strided_slice %11 {offsets = [0, 64], sizes = [8, 32], strides = [1, 1]} : vector<8x128xf32> to vector<8x32xf32>
    %25 = math.tanh %24 : vector<8x32xf32>
    %26 = vector.extract_strided_slice %11 {offsets = [0, 96], sizes = [8, 32], strides = [1, 1]} : vector<8x128xf32> to vector<8x32xf32>
    %27 = arith.negf %26 : vector<8x32xf32>
    %28 = math.exp %27 : vector<8x32xf32>
    %cst_12 = arith.constant 1.000000e+00 : f32
    %29 = vector.broadcast %cst_12 : f32 to vector<8x32xf32>
    %30 = arith.addf %29, %28 : vector<8x32xf32>
    %31 = arith.divf %29, %30 : vector<8x32xf32>
    %32 = arith.mulf %23, %8 : vector<8x32xf32>
    %33 = arith.mulf %17, %25 : vector<8x32xf32>
    %34 = arith.addf %32, %33 : vector<8x32xf32>
    %35 = math.tanh %34 : vector<8x32xf32>
    %36 = arith.mulf %31, %35 : vector<8x32xf32>
    %37 = vector.extract_strided_slice %5 {offsets = [8, 0], sizes = [8, 128], strides = [1, 1]} : vector<64x128xf32> to vector<8x128xf32>
    %cst_13 = arith.constant dense<0.000000e+00> : vector<8x128xf32>
    %38 = tpu.matmul %36, %6, %cst_13 {dimension_numbers = #tpu.dot_dimension_numbers<[1], [0], [0], [1], [0, 0, 1, 1], [], []>} : vector<8x32xf32>, vector<32x128xf32>, vector<8x128xf32> -> vector<8x128xf32>
    %39 = arith.addf %37, %38 : vector<8x128xf32>
    %40 = vector.extract_strided_slice %39 {offsets = [0, 0], sizes = [8, 32], strides = [1, 1]} : vector<8x128xf32> to vector<8x32xf32>
    %41 = arith.negf %40 : vector<8x32xf32>
    %42 = math.exp %41 : vector<8x32xf32>
    %cst_14 = arith.constant 1.000000e+00 : f32
    %43 = vector.broadcast %cst_14 : f32 to vector<8x32xf32>
    %44 = arith.addf %43, %42 : vector<8x32xf32>
    %45 = arith.divf %43, %44 : vector<8x32xf32>
    %46 = vector.extract_strided_slice %39 {offsets = [0, 32], sizes = [8, 32], strides = [1, 1]} : vector<8x128xf32> to vector<8x32xf32>
    %47 = arith.negf %46 : vector<8x32xf32>
    %48 = math.exp %47 : vector<8x32xf32>
    %cst_15 = arith.constant 1.000000e+00 : f32
    %49 = vector.broadcast %cst_15 : f32 to vector<8x32xf32>
    %50 = arith.addf %49, %48 : vector<8x32xf32>
    %51 = arith.divf %49, %50 : vector<8x32xf32>
    %52 = vector.extract_strided_slice %39 {offsets = [0, 64], sizes = [8, 32], strides = [1, 1]} : vector<8x128xf32> to vector<8x32xf32>
    %53 = math.tanh %52 : vector<8x32xf32>
    %54 = vector.extract_strided_slice %39 {offsets = [0, 96], sizes = [8, 32], strides = [1, 1]} : vector<8x128xf32> to vector<8x32xf32>
    %55 = arith.negf %54 : vector<8x32xf32>
    %56 = math.exp %55 : vector<8x32xf32>
    %cst_16 = arith.constant 1.000000e+00 : f32
    %57 = vector.broadcast %cst_16 : f32 to vector<8x32xf32>
    %58 = arith.addf %57, %56 : vector<8x32xf32>
    %59 = arith.divf %57, %58 : vector<8x32xf32>
    %60 = arith.mulf %51, %34 : vector<8x32xf32>
    %61 = arith.mulf %45, %53 : vector<8x32xf32>
    %62 = arith.addf %60, %61 : vector<8x32xf32>
    %63 = math.tanh %62 : vector<8x32xf32>
    %64 = arith.mulf %59, %63 : vector<8x32xf32>
    %65 = vector.extract_strided_slice %5 {offsets = [16, 0], sizes = [8, 128], strides = [1, 1]} : vector<64x128xf32> to vector<8x128xf32>
    %cst_17 = arith.constant dense<0.000000e+00> : vector<8x128xf32>
    %66 = tpu.matmul %64, %6, %cst_17 {dimension_numbers = #tpu.dot_dimension_numbers<[1], [0], [0], [1], [0, 0, 1, 1], [], []>} : vector<8x32xf32>, vector<32x128xf32>, vector<8x128xf32> -> vector<8x128xf32>
    %67 = arith.addf %65, %66 : vector<8x128xf32>
    %68 = vector.extract_strided_slice %67 {offsets = [0, 0], sizes = [8, 32], strides = [1, 1]} : vector<8x128xf32> to vector<8x32xf32>
    %69 = arith.negf %68 : vector<8x32xf32>
    %70 = math.exp %69 : vector<8x32xf32>
    %cst_18 = arith.constant 1.000000e+00 : f32
    %71 = vector.broadcast %cst_18 : f32 to vector<8x32xf32>
    %72 = arith.addf %71, %70 : vector<8x32xf32>
    %73 = arith.divf %71, %72 : vector<8x32xf32>
    %74 = vector.extract_strided_slice %67 {offsets = [0, 32], sizes = [8, 32], strides = [1, 1]} : vector<8x128xf32> to vector<8x32xf32>
    %75 = arith.negf %74 : vector<8x32xf32>
    %76 = math.exp %75 : vector<8x32xf32>
    %cst_19 = arith.constant 1.000000e+00 : f32
    %77 = vector.broadcast %cst_19 : f32 to vector<8x32xf32>
    %78 = arith.addf %77, %76 : vector<8x32xf32>
    %79 = arith.divf %77, %78 : vector<8x32xf32>
    %80 = vector.extract_strided_slice %67 {offsets = [0, 64], sizes = [8, 32], strides = [1, 1]} : vector<8x128xf32> to vector<8x32xf32>
    %81 = math.tanh %80 : vector<8x32xf32>
    %82 = vector.extract_strided_slice %67 {offsets = [0, 96], sizes = [8, 32], strides = [1, 1]} : vector<8x128xf32> to vector<8x32xf32>
    %83 = arith.negf %82 : vector<8x32xf32>
    %84 = math.exp %83 : vector<8x32xf32>
    %cst_20 = arith.constant 1.000000e+00 : f32
    %85 = vector.broadcast %cst_20 : f32 to vector<8x32xf32>
    %86 = arith.addf %85, %84 : vector<8x32xf32>
    %87 = arith.divf %85, %86 : vector<8x32xf32>
    %88 = arith.mulf %79, %62 : vector<8x32xf32>
    %89 = arith.mulf %73, %81 : vector<8x32xf32>
    %90 = arith.addf %88, %89 : vector<8x32xf32>
    %91 = math.tanh %90 : vector<8x32xf32>
    %92 = arith.mulf %87, %91 : vector<8x32xf32>
    %93 = vector.extract_strided_slice %5 {offsets = [24, 0], sizes = [8, 128], strides = [1, 1]} : vector<64x128xf32> to vector<8x128xf32>
    %cst_21 = arith.constant dense<0.000000e+00> : vector<8x128xf32>
    %94 = tpu.matmul %92, %6, %cst_21 {dimension_numbers = #tpu.dot_dimension_numbers<[1], [0], [0], [1], [0, 0, 1, 1], [], []>} : vector<8x32xf32>, vector<32x128xf32>, vector<8x128xf32> -> vector<8x128xf32>
    %95 = arith.addf %93, %94 : vector<8x128xf32>
    %96 = vector.extract_strided_slice %95 {offsets = [0, 0], sizes = [8, 32], strides = [1, 1]} : vector<8x128xf32> to vector<8x32xf32>
    %97 = arith.negf %96 : vector<8x32xf32>
    %98 = math.exp %97 : vector<8x32xf32>
    %cst_22 = arith.constant 1.000000e+00 : f32
    %99 = vector.broadcast %cst_22 : f32 to vector<8x32xf32>
    %100 = arith.addf %99, %98 : vector<8x32xf32>
    %101 = arith.divf %99, %100 : vector<8x32xf32>
    %102 = vector.extract_strided_slice %95 {offsets = [0, 32], sizes = [8, 32], strides = [1, 1]} : vector<8x128xf32> to vector<8x32xf32>
    %103 = arith.negf %102 : vector<8x32xf32>
    %104 = math.exp %103 : vector<8x32xf32>
    %cst_23 = arith.constant 1.000000e+00 : f32
    %105 = vector.broadcast %cst_23 : f32 to vector<8x32xf32>
    %106 = arith.addf %105, %104 : vector<8x32xf32>
    %107 = arith.divf %105, %106 : vector<8x32xf32>
    %108 = vector.extract_strided_slice %95 {offsets = [0, 64], sizes = [8, 32], strides = [1, 1]} : vector<8x128xf32> to vector<8x32xf32>
    %109 = math.tanh %108 : vector<8x32xf32>
    %110 = vector.extract_strided_slice %95 {offsets = [0, 96], sizes = [8, 32], strides = [1, 1]} : vector<8x128xf32> to vector<8x32xf32>
    %111 = arith.negf %110 : vector<8x32xf32>
    %112 = math.exp %111 : vector<8x32xf32>
    %cst_24 = arith.constant 1.000000e+00 : f32
    %113 = vector.broadcast %cst_24 : f32 to vector<8x32xf32>
    %114 = arith.addf %113, %112 : vector<8x32xf32>
    %115 = arith.divf %113, %114 : vector<8x32xf32>
    %116 = arith.mulf %107, %90 : vector<8x32xf32>
    %117 = arith.mulf %101, %109 : vector<8x32xf32>
    %118 = arith.addf %116, %117 : vector<8x32xf32>
    %119 = math.tanh %118 : vector<8x32xf32>
    %120 = arith.mulf %115, %119 : vector<8x32xf32>
    %121 = vector.extract_strided_slice %5 {offsets = [32, 0], sizes = [8, 128], strides = [1, 1]} : vector<64x128xf32> to vector<8x128xf32>
    %cst_25 = arith.constant dense<0.000000e+00> : vector<8x128xf32>
    %122 = tpu.matmul %120, %6, %cst_25 {dimension_numbers = #tpu.dot_dimension_numbers<[1], [0], [0], [1], [0, 0, 1, 1], [], []>} : vector<8x32xf32>, vector<32x128xf32>, vector<8x128xf32> -> vector<8x128xf32>
    %123 = arith.addf %121, %122 : vector<8x128xf32>
    %124 = vector.extract_strided_slice %123 {offsets = [0, 0], sizes = [8, 32], strides = [1, 1]} : vector<8x128xf32> to vector<8x32xf32>
    %125 = arith.negf %124 : vector<8x32xf32>
    %126 = math.exp %125 : vector<8x32xf32>
    %cst_26 = arith.constant 1.000000e+00 : f32
    %127 = vector.broadcast %cst_26 : f32 to vector<8x32xf32>
    %128 = arith.addf %127, %126 : vector<8x32xf32>
    %129 = arith.divf %127, %128 : vector<8x32xf32>
    %130 = vector.extract_strided_slice %123 {offsets = [0, 32], sizes = [8, 32], strides = [1, 1]} : vector<8x128xf32> to vector<8x32xf32>
    %131 = arith.negf %130 : vector<8x32xf32>
    %132 = math.exp %131 : vector<8x32xf32>
    %cst_27 = arith.constant 1.000000e+00 : f32
    %133 = vector.broadcast %cst_27 : f32 to vector<8x32xf32>
    %134 = arith.addf %133, %132 : vector<8x32xf32>
    %135 = arith.divf %133, %134 : vector<8x32xf32>
    %136 = vector.extract_strided_slice %123 {offsets = [0, 64], sizes = [8, 32], strides = [1, 1]} : vector<8x128xf32> to vector<8x32xf32>
    %137 = math.tanh %136 : vector<8x32xf32>
    %138 = vector.extract_strided_slice %123 {offsets = [0, 96], sizes = [8, 32], strides = [1, 1]} : vector<8x128xf32> to vector<8x32xf32>
    %139 = arith.negf %138 : vector<8x32xf32>
    %140 = math.exp %139 : vector<8x32xf32>
    %cst_28 = arith.constant 1.000000e+00 : f32
    %141 = vector.broadcast %cst_28 : f32 to vector<8x32xf32>
    %142 = arith.addf %141, %140 : vector<8x32xf32>
    %143 = arith.divf %141, %142 : vector<8x32xf32>
    %144 = arith.mulf %135, %118 : vector<8x32xf32>
    %145 = arith.mulf %129, %137 : vector<8x32xf32>
    %146 = arith.addf %144, %145 : vector<8x32xf32>
    %147 = math.tanh %146 : vector<8x32xf32>
    %148 = arith.mulf %143, %147 : vector<8x32xf32>
    %149 = vector.extract_strided_slice %5 {offsets = [40, 0], sizes = [8, 128], strides = [1, 1]} : vector<64x128xf32> to vector<8x128xf32>
    %cst_29 = arith.constant dense<0.000000e+00> : vector<8x128xf32>
    %150 = tpu.matmul %148, %6, %cst_29 {dimension_numbers = #tpu.dot_dimension_numbers<[1], [0], [0], [1], [0, 0, 1, 1], [], []>} : vector<8x32xf32>, vector<32x128xf32>, vector<8x128xf32> -> vector<8x128xf32>
    %151 = arith.addf %149, %150 : vector<8x128xf32>
    %152 = vector.extract_strided_slice %151 {offsets = [0, 0], sizes = [8, 32], strides = [1, 1]} : vector<8x128xf32> to vector<8x32xf32>
    %153 = arith.negf %152 : vector<8x32xf32>
    %154 = math.exp %153 : vector<8x32xf32>
    %cst_30 = arith.constant 1.000000e+00 : f32
    %155 = vector.broadcast %cst_30 : f32 to vector<8x32xf32>
    %156 = arith.addf %155, %154 : vector<8x32xf32>
    %157 = arith.divf %155, %156 : vector<8x32xf32>
    %158 = vector.extract_strided_slice %151 {offsets = [0, 32], sizes = [8, 32], strides = [1, 1]} : vector<8x128xf32> to vector<8x32xf32>
    %159 = arith.negf %158 : vector<8x32xf32>
    %160 = math.exp %159 : vector<8x32xf32>
    %cst_31 = arith.constant 1.000000e+00 : f32
    %161 = vector.broadcast %cst_31 : f32 to vector<8x32xf32>
    %162 = arith.addf %161, %160 : vector<8x32xf32>
    %163 = arith.divf %161, %162 : vector<8x32xf32>
    %164 = vector.extract_strided_slice %151 {offsets = [0, 64], sizes = [8, 32], strides = [1, 1]} : vector<8x128xf32> to vector<8x32xf32>
    %165 = math.tanh %164 : vector<8x32xf32>
    %166 = vector.extract_strided_slice %151 {offsets = [0, 96], sizes = [8, 32], strides = [1, 1]} : vector<8x128xf32> to vector<8x32xf32>
    %167 = arith.negf %166 : vector<8x32xf32>
    %168 = math.exp %167 : vector<8x32xf32>
    %cst_32 = arith.constant 1.000000e+00 : f32
    %169 = vector.broadcast %cst_32 : f32 to vector<8x32xf32>
    %170 = arith.addf %169, %168 : vector<8x32xf32>
    %171 = arith.divf %169, %170 : vector<8x32xf32>
    %172 = arith.mulf %163, %146 : vector<8x32xf32>
    %173 = arith.mulf %157, %165 : vector<8x32xf32>
    %174 = arith.addf %172, %173 : vector<8x32xf32>
    %175 = math.tanh %174 : vector<8x32xf32>
    %176 = arith.mulf %171, %175 : vector<8x32xf32>
    %177 = vector.extract_strided_slice %5 {offsets = [48, 0], sizes = [8, 128], strides = [1, 1]} : vector<64x128xf32> to vector<8x128xf32>
    %cst_33 = arith.constant dense<0.000000e+00> : vector<8x128xf32>
    %178 = tpu.matmul %176, %6, %cst_33 {dimension_numbers = #tpu.dot_dimension_numbers<[1], [0], [0], [1], [0, 0, 1, 1], [], []>} : vector<8x32xf32>, vector<32x128xf32>, vector<8x128xf32> -> vector<8x128xf32>
    %179 = arith.addf %177, %178 : vector<8x128xf32>
    %180 = vector.extract_strided_slice %179 {offsets = [0, 0], sizes = [8, 32], strides = [1, 1]} : vector<8x128xf32> to vector<8x32xf32>
    %181 = arith.negf %180 : vector<8x32xf32>
    %182 = math.exp %181 : vector<8x32xf32>
    %cst_34 = arith.constant 1.000000e+00 : f32
    %183 = vector.broadcast %cst_34 : f32 to vector<8x32xf32>
    %184 = arith.addf %183, %182 : vector<8x32xf32>
    %185 = arith.divf %183, %184 : vector<8x32xf32>
    %186 = vector.extract_strided_slice %179 {offsets = [0, 32], sizes = [8, 32], strides = [1, 1]} : vector<8x128xf32> to vector<8x32xf32>
    %187 = arith.negf %186 : vector<8x32xf32>
    %188 = math.exp %187 : vector<8x32xf32>
    %cst_35 = arith.constant 1.000000e+00 : f32
    %189 = vector.broadcast %cst_35 : f32 to vector<8x32xf32>
    %190 = arith.addf %189, %188 : vector<8x32xf32>
    %191 = arith.divf %189, %190 : vector<8x32xf32>
    %192 = vector.extract_strided_slice %179 {offsets = [0, 64], sizes = [8, 32], strides = [1, 1]} : vector<8x128xf32> to vector<8x32xf32>
    %193 = math.tanh %192 : vector<8x32xf32>
    %194 = vector.extract_strided_slice %179 {offsets = [0, 96], sizes = [8, 32], strides = [1, 1]} : vector<8x128xf32> to vector<8x32xf32>
    %195 = arith.negf %194 : vector<8x32xf32>
    %196 = math.exp %195 : vector<8x32xf32>
    %cst_36 = arith.constant 1.000000e+00 : f32
    %197 = vector.broadcast %cst_36 : f32 to vector<8x32xf32>
    %198 = arith.addf %197, %196 : vector<8x32xf32>
    %199 = arith.divf %197, %198 : vector<8x32xf32>
    %200 = arith.mulf %191, %174 : vector<8x32xf32>
    %201 = arith.mulf %185, %193 : vector<8x32xf32>
    %202 = arith.addf %200, %201 : vector<8x32xf32>
    %203 = math.tanh %202 : vector<8x32xf32>
    %204 = arith.mulf %199, %203 : vector<8x32xf32>
    %205 = vector.extract_strided_slice %5 {offsets = [56, 0], sizes = [8, 128], strides = [1, 1]} : vector<64x128xf32> to vector<8x128xf32>
    %cst_37 = arith.constant dense<0.000000e+00> : vector<8x128xf32>
    %206 = tpu.matmul %204, %6, %cst_37 {dimension_numbers = #tpu.dot_dimension_numbers<[1], [0], [0], [1], [0, 0, 1, 1], [], []>} : vector<8x32xf32>, vector<32x128xf32>, vector<8x128xf32> -> vector<8x128xf32>
    %207 = arith.addf %205, %206 : vector<8x128xf32>
    %208 = vector.extract_strided_slice %207 {offsets = [0, 0], sizes = [8, 32], strides = [1, 1]} : vector<8x128xf32> to vector<8x32xf32>
    %209 = arith.negf %208 : vector<8x32xf32>
    %210 = math.exp %209 : vector<8x32xf32>
    %cst_38 = arith.constant 1.000000e+00 : f32
    %211 = vector.broadcast %cst_38 : f32 to vector<8x32xf32>
    %212 = arith.addf %211, %210 : vector<8x32xf32>
    %213 = arith.divf %211, %212 : vector<8x32xf32>
    %214 = vector.extract_strided_slice %207 {offsets = [0, 32], sizes = [8, 32], strides = [1, 1]} : vector<8x128xf32> to vector<8x32xf32>
    %215 = arith.negf %214 : vector<8x32xf32>
    %216 = math.exp %215 : vector<8x32xf32>
    %cst_39 = arith.constant 1.000000e+00 : f32
    %217 = vector.broadcast %cst_39 : f32 to vector<8x32xf32>
    %218 = arith.addf %217, %216 : vector<8x32xf32>
    %219 = arith.divf %217, %218 : vector<8x32xf32>
    %220 = vector.extract_strided_slice %207 {offsets = [0, 64], sizes = [8, 32], strides = [1, 1]} : vector<8x128xf32> to vector<8x32xf32>
    %221 = math.tanh %220 : vector<8x32xf32>
    %222 = vector.extract_strided_slice %207 {offsets = [0, 96], sizes = [8, 32], strides = [1, 1]} : vector<8x128xf32> to vector<8x32xf32>
    %223 = arith.negf %222 : vector<8x32xf32>
    %224 = math.exp %223 : vector<8x32xf32>
    %cst_40 = arith.constant 1.000000e+00 : f32
    %225 = vector.broadcast %cst_40 : f32 to vector<8x32xf32>
    %226 = arith.addf %225, %224 : vector<8x32xf32>
    %227 = arith.divf %225, %226 : vector<8x32xf32>
    %228 = arith.mulf %219, %202 : vector<8x32xf32>
    %229 = arith.mulf %213, %221 : vector<8x32xf32>
    %230 = arith.addf %228, %229 : vector<8x32xf32>
    %231 = math.tanh %230 : vector<8x32xf32>
    %232 = arith.mulf %227, %231 : vector<8x32xf32>
    %c0_41 = arith.constant 0 : index
    %c0_42 = arith.constant 0 : index
    %233 = vector.load %arg6[%c0_41, %c0_42] : memref<32x128xf32, #tpu.memory_space<vmem>>, vector<32x128xf32>
    %c0_43 = arith.constant 0 : index
    %c0_44 = arith.constant 0 : index
    %234 = vector.load %arg7[%c0_43, %c0_44] : memref<1x128xf32, #tpu.memory_space<vmem>>, vector<1x128xf32>
    %c0_45 = arith.constant 0 : index
    %c0_46 = arith.constant 0 : index
    %235 = vector.load %arg8[%c0_45, %c0_46] : memref<32x2xf32, #tpu.memory_space<vmem>>, vector<32x2xf32>
    %c0_47 = arith.constant 0 : index
    %c0_48 = arith.constant 0 : index
    %236 = vector.load %arg9[%c0_47, %c0_48] : memref<1x2xf32, #tpu.memory_space<vmem>>, vector<1x2xf32>
    %c0_49 = arith.constant 0 : index
    %c0_50 = arith.constant 0 : index
    %237 = vector.load %arg1[%c0_49, %c0_50] : memref<48x2xf32, #tpu.memory_space<vmem>>, vector<48x2xf32>
    %c0_51 = arith.constant 0 : index
    %c0_52 = arith.constant 0 : index
    %238 = vector.load %arg5[%c0_51, %c0_52] : memref<2x128xf32, #tpu.memory_space<vmem>>, vector<2x128xf32>
    %cst_53 = arith.constant dense<0.000000e+00> : vector<48x128xf32>
    %239 = tpu.matmul %237, %238, %cst_53 {dimension_numbers = #tpu.dot_dimension_numbers<[1], [0], [0], [1], [0, 0, 1, 1], [], []>} : vector<48x2xf32>, vector<2x128xf32>, vector<48x128xf32> -> vector<48x128xf32>
    %cst_54 = arith.constant dense<0.000000e+00> : vector<8x128xf32>
    %240 = tpu.matmul %232, %233, %cst_54 {dimension_numbers = #tpu.dot_dimension_numbers<[1], [0], [0], [1], [0, 0, 1, 1], [], []>} : vector<8x32xf32>, vector<32x128xf32>, vector<8x128xf32> -> vector<8x128xf32>
    %241 = vector.broadcast %234 : vector<1x128xf32> to vector<8x128xf32>
    %242 = arith.addf %240, %241 : vector<8x128xf32>
    %243 = vector.extract_strided_slice %242 {offsets = [0, 0], sizes = [8, 32], strides = [1, 1]} : vector<8x128xf32> to vector<8x32xf32>
    %244 = arith.negf %243 : vector<8x32xf32>
    %245 = math.exp %244 : vector<8x32xf32>
    %cst_55 = arith.constant 1.000000e+00 : f32
    %246 = vector.broadcast %cst_55 : f32 to vector<8x32xf32>
    %247 = arith.addf %246, %245 : vector<8x32xf32>
    %248 = arith.divf %246, %247 : vector<8x32xf32>
    %249 = vector.extract_strided_slice %242 {offsets = [0, 32], sizes = [8, 32], strides = [1, 1]} : vector<8x128xf32> to vector<8x32xf32>
    %250 = arith.negf %249 : vector<8x32xf32>
    %251 = math.exp %250 : vector<8x32xf32>
    %cst_56 = arith.constant 1.000000e+00 : f32
    %252 = vector.broadcast %cst_56 : f32 to vector<8x32xf32>
    %253 = arith.addf %252, %251 : vector<8x32xf32>
    %254 = arith.divf %252, %253 : vector<8x32xf32>
    %255 = vector.extract_strided_slice %242 {offsets = [0, 64], sizes = [8, 32], strides = [1, 1]} : vector<8x128xf32> to vector<8x32xf32>
    %256 = math.tanh %255 : vector<8x32xf32>
    %257 = vector.extract_strided_slice %242 {offsets = [0, 96], sizes = [8, 32], strides = [1, 1]} : vector<8x128xf32> to vector<8x32xf32>
    %258 = arith.negf %257 : vector<8x32xf32>
    %259 = math.exp %258 : vector<8x32xf32>
    %cst_57 = arith.constant 1.000000e+00 : f32
    %260 = vector.broadcast %cst_57 : f32 to vector<8x32xf32>
    %261 = arith.addf %260, %259 : vector<8x32xf32>
    %262 = arith.divf %260, %261 : vector<8x32xf32>
    %263 = arith.mulf %254, %230 : vector<8x32xf32>
    %264 = arith.mulf %248, %256 : vector<8x32xf32>
    %265 = arith.addf %263, %264 : vector<8x32xf32>
    %266 = math.tanh %265 : vector<8x32xf32>
    %267 = arith.mulf %262, %266 : vector<8x32xf32>
    %cst_58 = arith.constant dense<0.000000e+00> : vector<8x2xf32>
    %268 = tpu.matmul %267, %235, %cst_58 {dimension_numbers = #tpu.dot_dimension_numbers<[1], [0], [0], [1], [0, 0, 1, 1], [], []>} : vector<8x32xf32>, vector<32x2xf32>, vector<8x2xf32> -> vector<8x2xf32>
    %269 = vector.broadcast %236 : vector<1x2xf32> to vector<8x2xf32>
    %270 = arith.addf %268, %269 : vector<8x2xf32>
    %cst_59 = arith.constant dense<0.000000e+00> : vector<8x128xf32>
    %271 = tpu.matmul %267, %233, %cst_59 {dimension_numbers = #tpu.dot_dimension_numbers<[1], [0], [0], [1], [0, 0, 1, 1], [], []>} : vector<8x32xf32>, vector<32x128xf32>, vector<8x128xf32> -> vector<8x128xf32>
    %272 = vector.broadcast %234 : vector<1x128xf32> to vector<8x128xf32>
    %273 = arith.addf %271, %272 : vector<8x128xf32>
    %274 = vector.extract_strided_slice %239 {offsets = [8, 0], sizes = [8, 128], strides = [1, 1]} : vector<48x128xf32> to vector<8x128xf32>
    %275 = arith.addf %273, %274 : vector<8x128xf32>
    %276 = vector.extract_strided_slice %275 {offsets = [0, 0], sizes = [8, 32], strides = [1, 1]} : vector<8x128xf32> to vector<8x32xf32>
    %277 = arith.negf %276 : vector<8x32xf32>
    %278 = math.exp %277 : vector<8x32xf32>
    %cst_60 = arith.constant 1.000000e+00 : f32
    %279 = vector.broadcast %cst_60 : f32 to vector<8x32xf32>
    %280 = arith.addf %279, %278 : vector<8x32xf32>
    %281 = arith.divf %279, %280 : vector<8x32xf32>
    %282 = vector.extract_strided_slice %275 {offsets = [0, 32], sizes = [8, 32], strides = [1, 1]} : vector<8x128xf32> to vector<8x32xf32>
    %283 = arith.negf %282 : vector<8x32xf32>
    %284 = math.exp %283 : vector<8x32xf32>
    %cst_61 = arith.constant 1.000000e+00 : f32
    %285 = vector.broadcast %cst_61 : f32 to vector<8x32xf32>
    %286 = arith.addf %285, %284 : vector<8x32xf32>
    %287 = arith.divf %285, %286 : vector<8x32xf32>
    %288 = vector.extract_strided_slice %275 {offsets = [0, 64], sizes = [8, 32], strides = [1, 1]} : vector<8x128xf32> to vector<8x32xf32>
    %289 = math.tanh %288 : vector<8x32xf32>
    %290 = vector.extract_strided_slice %275 {offsets = [0, 96], sizes = [8, 32], strides = [1, 1]} : vector<8x128xf32> to vector<8x32xf32>
    %291 = arith.negf %290 : vector<8x32xf32>
    %292 = math.exp %291 : vector<8x32xf32>
    %cst_62 = arith.constant 1.000000e+00 : f32
    %293 = vector.broadcast %cst_62 : f32 to vector<8x32xf32>
    %294 = arith.addf %293, %292 : vector<8x32xf32>
    %295 = arith.divf %293, %294 : vector<8x32xf32>
    %296 = arith.mulf %287, %265 : vector<8x32xf32>
    %297 = arith.mulf %281, %289 : vector<8x32xf32>
    %298 = arith.addf %296, %297 : vector<8x32xf32>
    %299 = math.tanh %298 : vector<8x32xf32>
    %300 = arith.mulf %295, %299 : vector<8x32xf32>
    %cst_63 = arith.constant dense<0.000000e+00> : vector<8x2xf32>
    %301 = tpu.matmul %300, %235, %cst_63 {dimension_numbers = #tpu.dot_dimension_numbers<[1], [0], [0], [1], [0, 0, 1, 1], [], []>} : vector<8x32xf32>, vector<32x2xf32>, vector<8x2xf32> -> vector<8x2xf32>
    %302 = vector.broadcast %236 : vector<1x2xf32> to vector<8x2xf32>
    %303 = arith.addf %301, %302 : vector<8x2xf32>
    %cst_64 = arith.constant dense<0.000000e+00> : vector<8x128xf32>
    %304 = tpu.matmul %300, %233, %cst_64 {dimension_numbers = #tpu.dot_dimension_numbers<[1], [0], [0], [1], [0, 0, 1, 1], [], []>} : vector<8x32xf32>, vector<32x128xf32>, vector<8x128xf32> -> vector<8x128xf32>
    %305 = vector.broadcast %234 : vector<1x128xf32> to vector<8x128xf32>
    %306 = arith.addf %304, %305 : vector<8x128xf32>
    %307 = vector.extract_strided_slice %239 {offsets = [16, 0], sizes = [8, 128], strides = [1, 1]} : vector<48x128xf32> to vector<8x128xf32>
    %308 = arith.addf %306, %307 : vector<8x128xf32>
    %309 = vector.extract_strided_slice %308 {offsets = [0, 0], sizes = [8, 32], strides = [1, 1]} : vector<8x128xf32> to vector<8x32xf32>
    %310 = arith.negf %309 : vector<8x32xf32>
    %311 = math.exp %310 : vector<8x32xf32>
    %cst_65 = arith.constant 1.000000e+00 : f32
    %312 = vector.broadcast %cst_65 : f32 to vector<8x32xf32>
    %313 = arith.addf %312, %311 : vector<8x32xf32>
    %314 = arith.divf %312, %313 : vector<8x32xf32>
    %315 = vector.extract_strided_slice %308 {offsets = [0, 32], sizes = [8, 32], strides = [1, 1]} : vector<8x128xf32> to vector<8x32xf32>
    %316 = arith.negf %315 : vector<8x32xf32>
    %317 = math.exp %316 : vector<8x32xf32>
    %cst_66 = arith.constant 1.000000e+00 : f32
    %318 = vector.broadcast %cst_66 : f32 to vector<8x32xf32>
    %319 = arith.addf %318, %317 : vector<8x32xf32>
    %320 = arith.divf %318, %319 : vector<8x32xf32>
    %321 = vector.extract_strided_slice %308 {offsets = [0, 64], sizes = [8, 32], strides = [1, 1]} : vector<8x128xf32> to vector<8x32xf32>
    %322 = math.tanh %321 : vector<8x32xf32>
    %323 = vector.extract_strided_slice %308 {offsets = [0, 96], sizes = [8, 32], strides = [1, 1]} : vector<8x128xf32> to vector<8x32xf32>
    %324 = arith.negf %323 : vector<8x32xf32>
    %325 = math.exp %324 : vector<8x32xf32>
    %cst_67 = arith.constant 1.000000e+00 : f32
    %326 = vector.broadcast %cst_67 : f32 to vector<8x32xf32>
    %327 = arith.addf %326, %325 : vector<8x32xf32>
    %328 = arith.divf %326, %327 : vector<8x32xf32>
    %329 = arith.mulf %320, %298 : vector<8x32xf32>
    %330 = arith.mulf %314, %322 : vector<8x32xf32>
    %331 = arith.addf %329, %330 : vector<8x32xf32>
    %332 = math.tanh %331 : vector<8x32xf32>
    %333 = arith.mulf %328, %332 : vector<8x32xf32>
    %cst_68 = arith.constant dense<0.000000e+00> : vector<8x2xf32>
    %334 = tpu.matmul %333, %235, %cst_68 {dimension_numbers = #tpu.dot_dimension_numbers<[1], [0], [0], [1], [0, 0, 1, 1], [], []>} : vector<8x32xf32>, vector<32x2xf32>, vector<8x2xf32> -> vector<8x2xf32>
    %335 = vector.broadcast %236 : vector<1x2xf32> to vector<8x2xf32>
    %336 = arith.addf %334, %335 : vector<8x2xf32>
    %cst_69 = arith.constant dense<0.000000e+00> : vector<8x128xf32>
    %337 = tpu.matmul %333, %233, %cst_69 {dimension_numbers = #tpu.dot_dimension_numbers<[1], [0], [0], [1], [0, 0, 1, 1], [], []>} : vector<8x32xf32>, vector<32x128xf32>, vector<8x128xf32> -> vector<8x128xf32>
    %338 = vector.broadcast %234 : vector<1x128xf32> to vector<8x128xf32>
    %339 = arith.addf %337, %338 : vector<8x128xf32>
    %340 = vector.extract_strided_slice %239 {offsets = [24, 0], sizes = [8, 128], strides = [1, 1]} : vector<48x128xf32> to vector<8x128xf32>
    %341 = arith.addf %339, %340 : vector<8x128xf32>
    %342 = vector.extract_strided_slice %341 {offsets = [0, 0], sizes = [8, 32], strides = [1, 1]} : vector<8x128xf32> to vector<8x32xf32>
    %343 = arith.negf %342 : vector<8x32xf32>
    %344 = math.exp %343 : vector<8x32xf32>
    %cst_70 = arith.constant 1.000000e+00 : f32
    %345 = vector.broadcast %cst_70 : f32 to vector<8x32xf32>
    %346 = arith.addf %345, %344 : vector<8x32xf32>
    %347 = arith.divf %345, %346 : vector<8x32xf32>
    %348 = vector.extract_strided_slice %341 {offsets = [0, 32], sizes = [8, 32], strides = [1, 1]} : vector<8x128xf32> to vector<8x32xf32>
    %349 = arith.negf %348 : vector<8x32xf32>
    %350 = math.exp %349 : vector<8x32xf32>
    %cst_71 = arith.constant 1.000000e+00 : f32
    %351 = vector.broadcast %cst_71 : f32 to vector<8x32xf32>
    %352 = arith.addf %351, %350 : vector<8x32xf32>
    %353 = arith.divf %351, %352 : vector<8x32xf32>
    %354 = vector.extract_strided_slice %341 {offsets = [0, 64], sizes = [8, 32], strides = [1, 1]} : vector<8x128xf32> to vector<8x32xf32>
    %355 = math.tanh %354 : vector<8x32xf32>
    %356 = vector.extract_strided_slice %341 {offsets = [0, 96], sizes = [8, 32], strides = [1, 1]} : vector<8x128xf32> to vector<8x32xf32>
    %357 = arith.negf %356 : vector<8x32xf32>
    %358 = math.exp %357 : vector<8x32xf32>
    %cst_72 = arith.constant 1.000000e+00 : f32
    %359 = vector.broadcast %cst_72 : f32 to vector<8x32xf32>
    %360 = arith.addf %359, %358 : vector<8x32xf32>
    %361 = arith.divf %359, %360 : vector<8x32xf32>
    %362 = arith.mulf %353, %331 : vector<8x32xf32>
    %363 = arith.mulf %347, %355 : vector<8x32xf32>
    %364 = arith.addf %362, %363 : vector<8x32xf32>
    %365 = math.tanh %364 : vector<8x32xf32>
    %366 = arith.mulf %361, %365 : vector<8x32xf32>
    %cst_73 = arith.constant dense<0.000000e+00> : vector<8x2xf32>
    %367 = tpu.matmul %366, %235, %cst_73 {dimension_numbers = #tpu.dot_dimension_numbers<[1], [0], [0], [1], [0, 0, 1, 1], [], []>} : vector<8x32xf32>, vector<32x2xf32>, vector<8x2xf32> -> vector<8x2xf32>
    %368 = vector.broadcast %236 : vector<1x2xf32> to vector<8x2xf32>
    %369 = arith.addf %367, %368 : vector<8x2xf32>
    %cst_74 = arith.constant dense<0.000000e+00> : vector<8x128xf32>
    %370 = tpu.matmul %366, %233, %cst_74 {dimension_numbers = #tpu.dot_dimension_numbers<[1], [0], [0], [1], [0, 0, 1, 1], [], []>} : vector<8x32xf32>, vector<32x128xf32>, vector<8x128xf32> -> vector<8x128xf32>
    %371 = vector.broadcast %234 : vector<1x128xf32> to vector<8x128xf32>
    %372 = arith.addf %370, %371 : vector<8x128xf32>
    %373 = vector.extract_strided_slice %239 {offsets = [32, 0], sizes = [8, 128], strides = [1, 1]} : vector<48x128xf32> to vector<8x128xf32>
    %374 = arith.addf %372, %373 : vector<8x128xf32>
    %375 = vector.extract_strided_slice %374 {offsets = [0, 0], sizes = [8, 32], strides = [1, 1]} : vector<8x128xf32> to vector<8x32xf32>
    %376 = arith.negf %375 : vector<8x32xf32>
    %377 = math.exp %376 : vector<8x32xf32>
    %cst_75 = arith.constant 1.000000e+00 : f32
    %378 = vector.broadcast %cst_75 : f32 to vector<8x32xf32>
    %379 = arith.addf %378, %377 : vector<8x32xf32>
    %380 = arith.divf %378, %379 : vector<8x32xf32>
    %381 = vector.extract_strided_slice %374 {offsets = [0, 32], sizes = [8, 32], strides = [1, 1]} : vector<8x128xf32> to vector<8x32xf32>
    %382 = arith.negf %381 : vector<8x32xf32>
    %383 = math.exp %382 : vector<8x32xf32>
    %cst_76 = arith.constant 1.000000e+00 : f32
    %384 = vector.broadcast %cst_76 : f32 to vector<8x32xf32>
    %385 = arith.addf %384, %383 : vector<8x32xf32>
    %386 = arith.divf %384, %385 : vector<8x32xf32>
    %387 = vector.extract_strided_slice %374 {offsets = [0, 64], sizes = [8, 32], strides = [1, 1]} : vector<8x128xf32> to vector<8x32xf32>
    %388 = math.tanh %387 : vector<8x32xf32>
    %389 = vector.extract_strided_slice %374 {offsets = [0, 96], sizes = [8, 32], strides = [1, 1]} : vector<8x128xf32> to vector<8x32xf32>
    %390 = arith.negf %389 : vector<8x32xf32>
    %391 = math.exp %390 : vector<8x32xf32>
    %cst_77 = arith.constant 1.000000e+00 : f32
    %392 = vector.broadcast %cst_77 : f32 to vector<8x32xf32>
    %393 = arith.addf %392, %391 : vector<8x32xf32>
    %394 = arith.divf %392, %393 : vector<8x32xf32>
    %395 = arith.mulf %386, %364 : vector<8x32xf32>
    %396 = arith.mulf %380, %388 : vector<8x32xf32>
    %397 = arith.addf %395, %396 : vector<8x32xf32>
    %398 = math.tanh %397 : vector<8x32xf32>
    %399 = arith.mulf %394, %398 : vector<8x32xf32>
    %cst_78 = arith.constant dense<0.000000e+00> : vector<8x2xf32>
    %400 = tpu.matmul %399, %235, %cst_78 {dimension_numbers = #tpu.dot_dimension_numbers<[1], [0], [0], [1], [0, 0, 1, 1], [], []>} : vector<8x32xf32>, vector<32x2xf32>, vector<8x2xf32> -> vector<8x2xf32>
    %401 = vector.broadcast %236 : vector<1x2xf32> to vector<8x2xf32>
    %402 = arith.addf %400, %401 : vector<8x2xf32>
    %cst_79 = arith.constant dense<0.000000e+00> : vector<8x128xf32>
    %403 = tpu.matmul %399, %233, %cst_79 {dimension_numbers = #tpu.dot_dimension_numbers<[1], [0], [0], [1], [0, 0, 1, 1], [], []>} : vector<8x32xf32>, vector<32x128xf32>, vector<8x128xf32> -> vector<8x128xf32>
    %404 = vector.broadcast %234 : vector<1x128xf32> to vector<8x128xf32>
    %405 = arith.addf %403, %404 : vector<8x128xf32>
    %406 = vector.extract_strided_slice %239 {offsets = [40, 0], sizes = [8, 128], strides = [1, 1]} : vector<48x128xf32> to vector<8x128xf32>
    %407 = arith.addf %405, %406 : vector<8x128xf32>
    %408 = vector.extract_strided_slice %407 {offsets = [0, 0], sizes = [8, 32], strides = [1, 1]} : vector<8x128xf32> to vector<8x32xf32>
    %409 = arith.negf %408 : vector<8x32xf32>
    %410 = math.exp %409 : vector<8x32xf32>
    %cst_80 = arith.constant 1.000000e+00 : f32
    %411 = vector.broadcast %cst_80 : f32 to vector<8x32xf32>
    %412 = arith.addf %411, %410 : vector<8x32xf32>
    %413 = arith.divf %411, %412 : vector<8x32xf32>
    %414 = vector.extract_strided_slice %407 {offsets = [0, 32], sizes = [8, 32], strides = [1, 1]} : vector<8x128xf32> to vector<8x32xf32>
    %415 = arith.negf %414 : vector<8x32xf32>
    %416 = math.exp %415 : vector<8x32xf32>
    %cst_81 = arith.constant 1.000000e+00 : f32
    %417 = vector.broadcast %cst_81 : f32 to vector<8x32xf32>
    %418 = arith.addf %417, %416 : vector<8x32xf32>
    %419 = arith.divf %417, %418 : vector<8x32xf32>
    %420 = vector.extract_strided_slice %407 {offsets = [0, 64], sizes = [8, 32], strides = [1, 1]} : vector<8x128xf32> to vector<8x32xf32>
    %421 = math.tanh %420 : vector<8x32xf32>
    %422 = vector.extract_strided_slice %407 {offsets = [0, 96], sizes = [8, 32], strides = [1, 1]} : vector<8x128xf32> to vector<8x32xf32>
    %423 = arith.negf %422 : vector<8x32xf32>
    %424 = math.exp %423 : vector<8x32xf32>
    %cst_82 = arith.constant 1.000000e+00 : f32
    %425 = vector.broadcast %cst_82 : f32 to vector<8x32xf32>
    %426 = arith.addf %425, %424 : vector<8x32xf32>
    %427 = arith.divf %425, %426 : vector<8x32xf32>
    %428 = arith.mulf %419, %397 : vector<8x32xf32>
    %429 = arith.mulf %413, %421 : vector<8x32xf32>
    %430 = arith.addf %428, %429 : vector<8x32xf32>
    %431 = math.tanh %430 : vector<8x32xf32>
    %432 = arith.mulf %427, %431 : vector<8x32xf32>
    %cst_83 = arith.constant dense<0.000000e+00> : vector<8x2xf32>
    %433 = tpu.matmul %432, %235, %cst_83 {dimension_numbers = #tpu.dot_dimension_numbers<[1], [0], [0], [1], [0, 0, 1, 1], [], []>} : vector<8x32xf32>, vector<32x2xf32>, vector<8x2xf32> -> vector<8x2xf32>
    %434 = vector.broadcast %236 : vector<1x2xf32> to vector<8x2xf32>
    %435 = arith.addf %433, %434 : vector<8x2xf32>
    %436 = tpu.concatenate %270, %303, %336, %369, %402, %435 in 0 : vector<8x2xf32>, vector<8x2xf32>, vector<8x2xf32>, vector<8x2xf32>, vector<8x2xf32>, vector<8x2xf32> -> vector<48x2xf32>
    %c0_84 = arith.constant 0 : index
    %c0_85 = arith.constant 0 : index
    %437 = vector.load %arg10[%c0_84, %c0_85] : memref<48x2xf32, #tpu.memory_space<vmem>>, vector<48x2xf32>
    tpu.vector_store %arg10[%c0_84, %c0_85], %436 {strides = array<i32>} : memref<48x2xf32, #tpu.memory_space<vmem>>, vector<48x2xf32>,
    return
  }
}

</mosaic_0001>

<llo_original>
// kernel: seq2seq_forward.1
$region0: #{seq2seq_forward.1}
  #allocation0 [shape = 'u32[]', space=smem, size = 0x4, offset = 0x4, fixed_abs, tag = 'smem constant byte address 0x4 - core index']
  #allocation1 [shape = 'u32[144,128]{1,0:T(1,128)}', space=vmem, size = 0x12000, scoped, tag = 'internal scratch']
  %s0 = inlined_call_operand.vmem [shape: f32[64,4], index: 0, kind: input, shape index: {}]
  %s1 = inlined_call_operand.vmem [shape: f32[48,2], index: 1, kind: input, shape index: {}]
  %s2 = inlined_call_operand.vmem [shape: f32[4,128], index: 2, kind: input, shape index: {}]
  %s3 = inlined_call_operand.vmem [shape: f32[32,128], index: 3, kind: input, shape index: {}]
  %s4 = inlined_call_operand.vmem [shape: f32[1,128], index: 4, kind: input, shape index: {}]
  %s5 = inlined_call_operand.vmem [shape: f32[2,128], index: 5, kind: input, shape index: {}]
  %s6 = inlined_call_operand.vmem [shape: f32[32,128], index: 6, kind: input, shape index: {}]
  %s7 = inlined_call_operand.vmem [shape: f32[1,128], index: 7, kind: input, shape index: {}]
  %s8 = inlined_call_operand.vmem [shape: f32[32,2], index: 8, kind: input, shape index: {}]
  %s9 = inlined_call_operand.vmem [shape: f32[1,2], index: 9, kind: input, shape index: {}]
  %s10 = inlined_call_operand.vmem [shape: f32[48,2], index: 10, kind: output, shape index: {}]
  %s11 = sld [smem:[#allocation0]]
  $region50: #{seq2seq_forward.1} parent=0
    _
  %s13 = ssub.s32 1, %s11
  %s14 = scalar_select 0, %s13, %s11
  // Predicated region
  $region2: #{seq2seq_forward.1} parent=0 // pred_check
    _
  $region3: #{seq2seq_forward.1} parent=0 // pred_check_branch
    %16 = sbr.rel (0) target = $region5
  $region4: #{seq2seq_forward.1} parent=0 // pred_region
    _
  $region5: #{seq2seq_forward.1} parent=0 // pred_fallthru
    _
  // Predicated region
  $region6: #{seq2seq_forward.1} parent=0 // pred_check
    _
  $region7: #{seq2seq_forward.1} parent=0 // pred_check_branch
    %18 = sbr.rel (0) target = $region9
  $region8: #{seq2seq_forward.1} parent=0 // pred_region
    _
  $region9: #{seq2seq_forward.1} parent=0 // pred_fallthru
    _
  // Predicated region
  $region10: #{seq2seq_forward.1} parent=0 // pred_check
    _
  $region11: #{seq2seq_forward.1} parent=0 // pred_check_branch
    %20 = sbr.rel (0) target = $region13
  $region12: #{seq2seq_forward.1} parent=0 // pred_region
    _
  $region13: #{seq2seq_forward.1} parent=0 // pred_fallthru
    _
  // Predicated region
  $region14: #{seq2seq_forward.1} parent=0 // pred_check
    _
  $region15: #{seq2seq_forward.1} parent=0 // pred_check_branch
    %22 = sbr.rel (0) target = $region17
  $region16: #{seq2seq_forward.1} parent=0 // pred_region
    _
  $region17: #{seq2seq_forward.1} parent=0 // pred_fallthru
    _
  // Predicated region
  $region18: #{seq2seq_forward.1} parent=0 // pred_check
    _
  $region19: #{seq2seq_forward.1} parent=0 // pred_check_branch
    %24 = sbr.rel (0) target = $region21
  $region20: #{seq2seq_forward.1} parent=0 // pred_region
    _
  $region21: #{seq2seq_forward.1} parent=0 // pred_fallthru
    _
  // Predicated region
  $region22: #{seq2seq_forward.1} parent=0 // pred_check
    _
  $region23: #{seq2seq_forward.1} parent=0 // pred_check_branch
    %26 = sbr.rel (0) target = $region25
  $region24: #{seq2seq_forward.1} parent=0 // pred_region
    _
  $region25: #{seq2seq_forward.1} parent=0 // pred_fallthru
    _
  // Predicated region
  $region26: #{seq2seq_forward.1} parent=0 // pred_check
    _
  $region27: #{seq2seq_forward.1} parent=0 // pred_check_branch
    %28 = sbr.rel (0) target = $region29
  $region28: #{seq2seq_forward.1} parent=0 // pred_region
    _
  $region29: #{seq2seq_forward.1} parent=0 // pred_fallthru
    _
  // Predicated region
  $region30: #{seq2seq_forward.1} parent=0 // pred_check
    _
  $region31: #{seq2seq_forward.1} parent=0 // pred_check_branch
    %30 = sbr.rel (0) target = $region33
  $region32: #{seq2seq_forward.1} parent=0 // pred_region
    _
  $region33: #{seq2seq_forward.1} parent=0 // pred_fallthru
    _
  // Predicated region
  $region34: #{seq2seq_forward.1} parent=0 // pred_check
    _
  $region35: #{seq2seq_forward.1} parent=0 // pred_check_branch
    %32 = sbr.rel (0) target = $region37
  $region36: #{seq2seq_forward.1} parent=0 // pred_region
    _
  $region37: #{seq2seq_forward.1} parent=0 // pred_fallthru
    _
  // Predicated region
  $region38: #{seq2seq_forward.1} parent=0 // pred_check
    _
  $region39: #{seq2seq_forward.1} parent=0 // pred_check_branch
    %34 = sbr.rel (0) target = $region41
  $region40: #{seq2seq_forward.1} parent=0 // pred_region
    _
  $region41: #{seq2seq_forward.1} parent=0 // pred_fallthru
    _
  %v35 = vld [vmem:[%s0] sm:$0xff]
  %v36 = vld [vmem:[%s0 + $0x8] sm:$0xff]
  %v37 = vld [vmem:[%s0 + $0x10] sm:$0xff]
  %v38 = vld [vmem:[%s0 + $0x18] sm:$0xff]
  %v39 = vld [vmem:[%s0 + $0x20] sm:$0xff]
  %v40 = vld [vmem:[%s0 + $0x28] sm:$0xff]
  %v41 = vld [vmem:[%s0 + $0x30] sm:$0xff]
  %v42 = vld [vmem:[%s0 + $0x38] sm:$0xff]
  %v43 = vld [vmem:[%s2] sm:$0xf]
  %v44 = vld [vmem:[%s4] sm:$0x1]
  %v46 = vlaneseq
  %v47 = vshrl.u32 %v46, 7
  %v48 = vsub.s32 0, %v47
  %v49 = vrot.slane %v44, %v48
  %vm51 = vcmask 31744
  %v53 = vsel %vm51, %v35, 0
  %v56 = vsel %vm51, %v36, 0
  %v59 = vsel %vm51, %v37, 0
  %v62 = vsel %vm51, %v38, 0
  %v65 = vsel %vm51, %v39, 0
  %v68 = vsel %vm51, %v40, 0
  %v71 = vsel %vm51, %v41, 0
  %v74 = vsel %vm51, %v42, 0
  %vm76 = vcmask 1043456
  %v78 = vsel %vm76, %v43, 0
  %80 = vmatprep.subr.mxu0 0.0
  %81 = vmatpush1.msra.mxu0 %v78
  %82 = vmatprep.subr.mxu0 0.0
  %83 = vmatpush1.msra.mxu0 0.0
  %84 = vmatprep.subr.mxu0 0.0
  %85 = vmatpush1.msra.mxu0 0.0
  %86 = vmatprep.subr.mxu0 0.0
  %87 = vmatpush1.msra.mxu0 0.0
  %88 = vmatprep.subr.mxu0 0.0
  %89 = vmatpush1.msra.mxu0 0.0
  %90 = vmatprep.subr.mxu0 0.0
  %91 = vmatpush1.msra.mxu0 0.0
  %92 = vmatprep.subr.mxu0 0.0
  %93 = vmatpush1.msra.mxu0 0.0
  %94 = vmatprep.subr.mxu0 0.0
  %95 = vmatpush1.msra.mxu0 0.0
  %96 = vmatprep.subr.mxu0 0.0
  %97 = vmatpush1.msra.mxu0 0.0
  %98 = vmatprep.subr.mxu0 0.0
  %99 = vmatpush1.msra.mxu0 0.0
  %100 = vmatprep.subr.mxu0 0.0
  %101 = vmatpush1.msra.mxu0 0.0
  %102 = vmatprep.subr.mxu0 0.0
  %103 = vmatpush1.msra.mxu0 0.0
  %104 = vmatprep.subr.mxu0 0.0
  %105 = vmatpush1.msra.mxu0 0.0
  %106 = vmatprep.subr.mxu0 0.0
  %107 = vmatpush1.msra.mxu0 0.0
  %108 = vmatprep.subr.mxu0 0.0
  %109 = vmatpush1.msra.mxu0 0.0
  %110 = vmatprep.subr.mxu0 0.0
  %111 = vmatpush1.msra.mxu0 0.0
  %112 = vmatprep.subr.mxu0 0.0
  %113 = vmatpush1.msra.mxu0 0.0
  %114 = vmatprep.subr.mxu0 0.0
  %115 = vmatpush1.msra.mxu0 0.0
  %116 = vmatprep.subr.mxu0 0.0
  %117 = vmatpush1.msra.mxu0 0.0
  %118 = vmatprep.subr.mxu0 0.0
  %119 = vmatpush1.msra.mxu0 0.0
  %120 = vmatprep.subr.mxu0 0.0
  %121 = vmatpush1.msra.mxu0 0.0
  %122 = vmatprep.subr.mxu0 0.0
  %123 = vmatpush1.msra.mxu0 0.0
  %124 = vmatprep.subr.mxu0 0.0
  %125 = vmatpush1.msra.mxu0 0.0
  %126 = vmatprep.subr.mxu0 0.0
  %127 = vmatpush1.msra.mxu0 0.0
  %128 = vmatprep.subr.mxu0 0.0
  %129 = vmatpush1.msra.mxu0 0.0
  %130 = vmatprep.subr.mxu0 0.0
  %131 = vmatpush1.msra.mxu0 0.0
  %132 = vmatprep.subr.mxu0 0.0
  %133 = vmatpush1.msra.mxu0 0.0
  %134 = vmatprep.subr.mxu0 0.0
  %135 = vmatpush1.msra.mxu0 0.0
  %136 = vmatprep.subr.mxu0 0.0
  %137 = vmatpush1.msra.mxu0 0.0
  %138 = vmatprep.subr.mxu0 0.0
  %139 = vmatpush1.msra.mxu0 0.0
  %140 = vmatprep.subr.mxu0 0.0
  %141 = vmatpush1.msra.mxu0 0.0
  %142 = vmatprep.subr.mxu0 0.0
  %143 = vmatpush1.msra.mxu0 0.0
  %144 = vmatprep.mubr.f32.mxu0 0.0
  %145 = vmatmul.mubr.f32.gmra.mrb[0].mxu0 %v53
  %v146 = vpop.f32.mrb[0].mxu0
  %v147 = vadd.f32 %v49, %v146
  %v148 = vpop.f32.mrb[0].mxu0
  %149 = vmatprep.mubr.f32.mxu0 0.0
  %150 = vmatmul.mubr.f32.gmra.mrb[0].mxu0 %v56
  %v151 = vpop.f32.mrb[0].mxu0
  %v152 = vadd.f32 %v49, %v151
  %v153 = vpop.f32.mrb[0].mxu0
  %154 = vmatprep.mubr.f32.mxu0 0.0
  %155 = vmatmul.mubr.f32.gmra.mrb[0].mxu0 %v59
  %v156 = vpop.f32.mrb[0].mxu0
  %v157 = vadd.f32 %v49, %v156
  %v158 = vpop.f32.mrb[0].mxu0
  %159 = vmatprep.mubr.f32.mxu0 0.0
  %160 = vmatmul.mubr.f32.gmra.mrb[0].mxu0 %v62
  %v161 = vpop.f32.mrb[0].mxu0
  %v162 = vadd.f32 %v49, %v161
  %v163 = vpop.f32.mrb[0].mxu0
  %164 = vmatprep.mubr.f32.mxu0 0.0
  %165 = vmatmul.mubr.f32.gmra.mrb[0].mxu0 %v65
  %v166 = vpop.f32.mrb[0].mxu0
  %v167 = vadd.f32 %v49, %v166
  %v168 = vpop.f32.mrb[0].mxu0
  %169 = vmatprep.mubr.f32.mxu0 0.0
  %170 = vmatmul.mubr.f32.gmra.mrb[0].mxu0 %v68
  %v171 = vpop.f32.mrb[0].mxu0
  %v172 = vadd.f32 %v49, %v171
  %v173 = vpop.f32.mrb[0].mxu0
  %174 = vmatprep.mubr.f32.mxu0 0.0
  %175 = vmatmul.mubr.f32.gmra.mrb[0].mxu0 %v71
  %v176 = vpop.f32.mrb[0].mxu0
  %v177 = vadd.f32 %v49, %v176
  %v178 = vpop.f32.mrb[0].mxu0
  %179 = vmatprep.mubr.f32.mxu0 0.0
  %180 = vmatmul.mubr.f32.gmra.mrb[0].mxu0 %v74
  %v181 = vpop.f32.mrb[0].mxu0
  %v182 = vadd.f32 %v49, %v181
  %v183 = vpop.f32.mrb[0].mxu0
  %184 = vdwg.mxu0
  %v185 = vld [vmem:[%s3] sm:$0xff]
  %v186 = vld [vmem:[%s3 + $0x8] sm:$0xff]
  %v187 = vld [vmem:[%s3 + $0x10] sm:$0xff]
  %v188 = vld [vmem:[%s3 + $0x18] sm:$0xff]
  %vm189 = vcmask 261120
  %v191 = vsel %vm189, 0.0, 0
  %193 = vmatprep.subr.mxu0 0.0
  %194 = vmatpush1.msra.mxu0 %v185
  %195 = vmatprep.subr.mxu0 0.0
  %196 = vmatpush1.msra.mxu0 %v186
  %197 = vmatprep.subr.mxu0 0.0
  %198 = vmatpush1.msra.mxu0 %v187
  %199 = vmatprep.subr.mxu0 0.0
  %200 = vmatpush1.msra.mxu0 %v188
  %201 = vmatprep.subr.mxu0 0.0
  %202 = vmatpush1.msra.mxu0 0.0
  %203 = vmatprep.subr.mxu0 0.0
  %204 = vmatpush1.msra.mxu0 0.0
  %205 = vmatprep.subr.mxu0 0.0
  %206 = vmatpush1.msra.mxu0 0.0
  %207 = vmatprep.subr.mxu0 0.0
  %208 = vmatpush1.msra.mxu0 0.0
  %209 = vmatprep.subr.mxu0 0.0
  %210 = vmatpush1.msra.mxu0 0.0
  %211 = vmatprep.subr.mxu0 0.0
  %212 = vmatpush1.msra.mxu0 0.0
  %213 = vmatprep.subr.mxu0 0.0
  %214 = vmatpush1.msra.mxu0 0.0
  %215 = vmatprep.subr.mxu0 0.0
  %216 = vmatpush1.msra.mxu0 0.0
  %217 = vmatprep.subr.mxu0 0.0
  %218 = vmatpush1.msra.mxu0 0.0
  %219 = vmatprep.subr.mxu0 0.0
  %220 = vmatpush1.msra.mxu0 0.0
  %221 = vmatprep.subr.mxu0 0.0
  %222 = vmatpush1.msra.mxu0 0.0
  %223 = vmatprep.subr.mxu0 0.0
  %224 = vmatpush1.msra.mxu0 0.0
  %225 = vmatprep.subr.mxu0 0.0
  %226 = vmatpush1.msra.mxu0 0.0
  %227 = vmatprep.subr.mxu0 0.0
  %228 = vmatpush1.msra.mxu0 0.0
  %229 = vmatprep.subr.mxu0 0.0
  %230 = vmatpush1.msra.mxu0 0.0
  %231 = vmatprep.subr.mxu0 0.0
  %232 = vmatpush1.msra.mxu0 0.0
  %233 = vmatprep.subr.mxu0 0.0
  %234 = vmatpush1.msra.mxu0 0.0
  %235 = vmatprep.subr.mxu0 0.0
  %236 = vmatpush1.msra.mxu0 0.0
  %237 = vmatprep.subr.mxu0 0.0
  %238 = vmatpush1.msra.mxu0 0.0
  %239 = vmatprep.subr.mxu0 0.0
  %240 = vmatpush1.msra.mxu0 0.0
  %241 = vmatprep.subr.mxu0 0.0
  %242 = vmatpush1.msra.mxu0 0.0
  %243 = vmatprep.subr.mxu0 0.0
  %244 = vmatpush1.msra.mxu0 0.0
  %245 = vmatprep.subr.mxu0 0.0
  %246 = vmatpush1.msra.mxu0 0.0
  %247 = vmatprep.subr.mxu0 0.0
  %248 = vmatpush1.msra.mxu0 0.0
  %249 = vmatprep.subr.mxu0 0.0
  %250 = vmatpush1.msra.mxu0 0.0
  %251 = vmatprep.subr.mxu0 0.0
  %252 = vmatpush1.msra.mxu0 0.0
  %253 = vmatprep.subr.mxu0 0.0
  %254 = vmatpush1.msra.mxu0 0.0
  %255 = vmatprep.subr.mxu0 0.0
  %256 = vmatpush1.msra.mxu0 0.0
  %257 = vmatprep.mubr.f32.mxu0 0.0
  %258 = vmatmul.mubr.f32.gmra.mrb[0].mxu0 %v191
  %v259 = vpop.f32.mrb[0].mxu0
  %v260 = vadd.f32 0.0, %v259
  %v261 = vpop.f32.mrb[0].mxu0
  %262 = vdwg.mxu0
  %v263 = vadd.f32 %v147, %v260
  %v264 = vxor.u32 %v263, 2147483648
  %v265 = vmul.f32 %v264, 1.442695
  %v266 = vpow.pop %v265
  %v267 = vadd.f32 %v266, 1.0
  %v268 = vrcp.pop %v267
  %v269 = vmul.f32 1.0, %v268
  %v270 = vtanh.pop %v263
  %v271 = vmul.f32 %v269, 0.0
  %273 = vrot.lane.b32.xlu0 %v270, 64
  %v274 = vpop.permute.xlu0 %273
  %v276 = vmul.f32 %v269, %v274
  %278 = vrot.lane.b32.xlu0 %v276, 32
  %v279 = vpop.permute.xlu0 %278
  %v281 = vadd.f32 %v271, %v279
  %v282 = vtanh.pop %v281
  %284 = vrot.lane.b32.xlu0 %v282, 64
  %v285 = vpop.permute.xlu0 %284
  %v287 = vmul.f32 %v269, %v285
  %289 = vrot.lane.b32.xlu0 %v287, 32
  %v290 = vpop.permute.xlu0 %289
  %v291 = vsel %vm189, %v290, 0
  %293 = vmatprep.subr.mxu0 0.0
  %294 = vmatpush1.msra.mxu0 %v185
  %295 = vmatprep.subr.mxu0 0.0
  %296 = vmatpush1.msra.mxu0 %v186
  %297 = vmatprep.subr.mxu0 0.0
  %298 = vmatpush1.msra.mxu0 %v187
  %299 = vmatprep.subr.mxu0 0.0
  %300 = vmatpush1.msra.mxu0 %v188
  %301 = vmatprep.subr.mxu0 0.0
  %302 = vmatpush1.msra.mxu0 0.0
  %303 = vmatprep.subr.mxu0 0.0
  %304 = vmatpush1.msra.mxu0 0.0
  %305 = vmatprep.subr.mxu0 0.0
  %306 = vmatpush1.msra.mxu0 0.0
  %307 = vmatprep.subr.mxu0 0.0
  %308 = vmatpush1.msra.mxu0 0.0
  %309 = vmatprep.subr.mxu0 0.0
  %310 = vmatpush1.msra.mxu0 0.0
  %311 = vmatprep.subr.mxu0 0.0
  %312 = vmatpush1.msra.mxu0 0.0
  %313 = vmatprep.subr.mxu0 0.0
  %314 = vmatpush1.msra.mxu0 0.0
  %315 = vmatprep.subr.mxu0 0.0
  %316 = vmatpush1.msra.mxu0 0.0
  %317 = vmatprep.subr.mxu0 0.0
  %318 = vmatpush1.msra.mxu0 0.0
  %319 = vmatprep.subr.mxu0 0.0
  %320 = vmatpush1.msra.mxu0 0.0
  %321 = vmatprep.subr.mxu0 0.0
  %322 = vmatpush1.msra.mxu0 0.0
  %323 = vmatprep.subr.mxu0 0.0
  %324 = vmatpush1.msra.mxu0 0.0
  %325 = vmatprep.subr.mxu0 0.0
  %326 = vmatpush1.msra.mxu0 0.0
  %327 = vmatprep.subr.mxu0 0.0
  %328 = vmatpush1.msra.mxu0 0.0
  %329 = vmatprep.subr.mxu0 0.0
  %330 = vmatpush1.msra.mxu0 0.0
  %331 = vmatprep.subr.mxu0 0.0
  %332 = vmatpush1.msra.mxu0 0.0
  %333 = vmatprep.subr.mxu0 0.0
  %334 = vmatpush1.msra.mxu0 0.0
  %335 = vmatprep.subr.mxu0 0.0
  %336 = vmatpush1.msra.mxu0 0.0
  %337 = vmatprep.subr.mxu0 0.0
  %338 = vmatpush1.msra.mxu0 0.0
  %339 = vmatprep.subr.mxu0 0.0
  %340 = vmatpush1.msra.mxu0 0.0
  %341 = vmatprep.subr.mxu0 0.0
  %342 = vmatpush1.msra.mxu0 0.0
  %343 = vmatprep.subr.mxu0 0.0
  %344 = vmatpush1.msra.mxu0 0.0
  %345 = vmatprep.subr.mxu0 0.0
  %346 = vmatpush1.msra.mxu0 0.0
  %347 = vmatprep.subr.mxu0 0.0
  %348 = vmatpush1.msra.mxu0 0.0
  %349 = vmatprep.subr.mxu0 0.0
  %350 = vmatpush1.msra.mxu0 0.0
  %351 = vmatprep.subr.mxu0 0.0
  %352 = vmatpush1.msra.mxu0 0.0
  %353 = vmatprep.subr.mxu0 0.0
  %354 = vmatpush1.msra.mxu0 0.0
  %355 = vmatprep.subr.mxu0 0.0
  %356 = vmatpush1.msra.mxu0 0.0
  %357 = vmatprep.mubr.f32.mxu0 0.0
  %358 = vmatmul.mubr.f32.gmra.mrb[0].mxu0 %v291
  %v359 = vpop.f32.mrb[0].mxu0
  %v360 = vadd.f32 0.0, %v359
  %v361 = vpop.f32.mrb[0].mxu0
  %362 = vdwg.mxu0
  %v363 = vadd.f32 %v152, %v360
  %v364 = vxor.u32 %v363, 2147483648
  %v365 = vmul.f32 %v364, 1.442695
  %v366 = vpow.pop %v365
  %v367 = vadd.f32 %v366, 1.0
  %v368 = vrcp.pop %v367
  %v369 = vmul.f32 1.0, %v368
  %v370 = vtanh.pop %v363
  %v371 = vmul.f32 %v369, %v281
  %373 = vrot.lane.b32.xlu0 %v370, 64
  %v374 = vpop.permute.xlu0 %373
  %v376 = vmul.f32 %v369, %v374
  %378 = vrot.lane.b32.xlu0 %v376, 32
  %v379 = vpop.permute.xlu0 %378
  %v381 = vadd.f32 %v371, %v379
  %v382 = vtanh.pop %v381
  %384 = vrot.lane.b32.xlu0 %v382, 64
  %v385 = vpop.permute.xlu0 %384
  %v387 = vmul.f32 %v369, %v385
  %389 = vrot.lane.b32.xlu0 %v387, 32
  %v390 = vpop.permute.xlu0 %389
  %v391 = vsel %vm189, %v390, 0
  %393 = vmatprep.subr.mxu0 0.0
  %394 = vmatpush1.msra.mxu0 %v185
  %395 = vmatprep.subr.mxu0 0.0
  %396 = vmatpush1.msra.mxu0 %v186
  %397 = vmatprep.subr.mxu0 0.0
  %398 = vmatpush1.msra.mxu0 %v187
  %399 = vmatprep.subr.mxu0 0.0
  %400 = vmatpush1.msra.mxu0 %v188
  %401 = vmatprep.subr.mxu0 0.0
  %402 = vmatpush1.msra.mxu0 0.0
  %403 = vmatprep.subr.mxu0 0.0
  %404 = vmatpush1.msra.mxu0 0.0
  %405 = vmatprep.subr.mxu0 0.0
  %406 = vmatpush1.msra.mxu0 0.0
  %407 = vmatprep.subr.mxu0 0.0
  %408 = vmatpush1.msra.mxu0 0.0
  %409 = vmatprep.subr.mxu0 0.0
  %410 = vmatpush1.msra.mxu0 0.0
  %411 = vmatprep.subr.mxu0 0.0
  %412 = vmatpush1.msra.mxu0 0.0
  %413 = vmatprep.subr.mxu0 0.0
  %414 = vmatpush1.msra.mxu0 0.0
  %415 = vmatprep.subr.mxu0 0.0
  %416 = vmatpush1.msra.mxu0 0.0
  %417 = vmatprep.subr.mxu0 0.0
  %418 = vmatpush1.msra.mxu0 0.0
  %419 = vmatprep.subr.mxu0 0.0
  %420 = vmatpush1.msra.mxu0 0.0
  %421 = vmatprep.subr.mxu0 0.0
  %422 = vmatpush1.msra.mxu0 0.0
  %423 = vmatprep.subr.mxu0 0.0
  %424 = vmatpush1.msra.mxu0 0.0
  %425 = vmatprep.subr.mxu0 0.0
  %426 = vmatpush1.msra.mxu0 0.0
  %427 = vmatprep.subr.mxu0 0.0
  %428 = vmatpush1.msra.mxu0 0.0
  %429 = vmatprep.subr.mxu0 0.0
  %430 = vmatpush1.msra.mxu0 0.0
  %431 = vmatprep.subr.mxu0 0.0
  %432 = vmatpush1.msra.mxu0 0.0
  %433 = vmatprep.subr.mxu0 0.0
  %434 = vmatpush1.msra.mxu0 0.0
  %435 = vmatprep.subr.mxu0 0.0
  %436 = vmatpush1.msra.mxu0 0.0
  %437 = vmatprep.subr.mxu0 0.0
  %438 = vmatpush1.msra.mxu0 0.0
  %439 = vmatprep.subr.mxu0 0.0
  %440 = vmatpush1.msra.mxu0 0.0
  %441 = vmatprep.subr.mxu0 0.0
  %442 = vmatpush1.msra.mxu0 0.0
  %443 = vmatprep.subr.mxu0 0.0
  %444 = vmatpush1.msra.mxu0 0.0
  %445 = vmatprep.subr.mxu0 0.0
  %446 = vmatpush1.msra.mxu0 0.0
  %447 = vmatprep.subr.mxu0 0.0
  %448 = vmatpush1.msra.mxu0 0.0
  %449 = vmatprep.subr.mxu0 0.0
  %450 = vmatpush1.msra.mxu0 0.0
  %451 = vmatprep.subr.mxu0 0.0
  %452 = vmatpush1.msra.mxu0 0.0
  %453 = vmatprep.subr.mxu0 0.0
  %454 = vmatpush1.msra.mxu0 0.0
  %455 = vmatprep.subr.mxu0 0.0
  %456 = vmatpush1.msra.mxu0 0.0
  %457 = vmatprep.mubr.f32.mxu0 0.0
  %458 = vmatmul.mubr.f32.gmra.mrb[0].mxu0 %v391
  %v459 = vpop.f32.mrb[0].mxu0
  %v460 = vadd.f32 0.0, %v459
  %v461 = vpop.f32.mrb[0].mxu0
  %462 = vdwg.mxu0
  %v463 = vadd.f32 %v157, %v460
  %v464 = vxor.u32 %v463, 2147483648
  %v465 = vmul.f32 %v464, 1.442695
  %v466 = vpow.pop %v465
  %v467 = vadd.f32 %v466, 1.0
  %v468 = vrcp.pop %v467
  %v469 = vmul.f32 1.0, %v468
  %v470 = vtanh.pop %v463
  %v471 = vmul.f32 %v469, %v381
  %473 = vrot.lane.b32.xlu0 %v470, 64
  %v474 = vpop.permute.xlu0 %473
  %v476 = vmul.f32 %v469, %v474
  %478 = vrot.lane.b32.xlu0 %v476, 32
  %v479 = vpop.permute.xlu0 %478
  %v481 = vadd.f32 %v471, %v479
  %v482 = vtanh.pop %v481
  %484 = vrot.lane.b32.xlu0 %v482, 64
  %v485 = vpop.permute.xlu0 %484
  %v487 = vmul.f32 %v469, %v485
  %489 = vrot.lane.b32.xlu0 %v487, 32
  %v490 = vpop.permute.xlu0 %489
  %v491 = vsel %vm189, %v490, 0
  %493 = vmatprep.subr.mxu0 0.0
  %494 = vmatpush1.msra.mxu0 %v185
  %495 = vmatprep.subr.mxu0 0.0
  %496 = vmatpush1.msra.mxu0 %v186
  %497 = vmatprep.subr.mxu0 0.0
  %498 = vmatpush1.msra.mxu0 %v187
  %499 = vmatprep.subr.mxu0 0.0
  %500 = vmatpush1.msra.mxu0 %v188
  %501 = vmatprep.subr.mxu0 0.0
  %502 = vmatpush1.msra.mxu0 0.0
  %503 = vmatprep.subr.mxu0 0.0
  %504 = vmatpush1.msra.mxu0 0.0
  %505 = vmatprep.subr.mxu0 0.0
  %506 = vmatpush1.msra.mxu0 0.0
  %507 = vmatprep.subr.mxu0 0.0
  %508 = vmatpush1.msra.mxu0 0.0
  %509 = vmatprep.subr.mxu0 0.0
  %510 = vmatpush1.msra.mxu0 0.0
  %511 = vmatprep.subr.mxu0 0.0
  %512 = vmatpush1.msra.mxu0 0.0
  %513 = vmatprep.subr.mxu0 0.0
  %514 = vmatpush1.msra.mxu0 0.0
  %515 = vmatprep.subr.mxu0 0.0
  %516 = vmatpush1.msra.mxu0 0.0
  %517 = vmatprep.subr.mxu0 0.0
  %518 = vmatpush1.msra.mxu0 0.0
  %519 = vmatprep.subr.mxu0 0.0
  %520 = vmatpush1.msra.mxu0 0.0
  %521 = vmatprep.subr.mxu0 0.0
  %522 = vmatpush1.msra.mxu0 0.0
  %523 = vmatprep.subr.mxu0 0.0
  %524 = vmatpush1.msra.mxu0 0.0
  %525 = vmatprep.subr.mxu0 0.0
  %526 = vmatpush1.msra.mxu0 0.0
  %527 = vmatprep.subr.mxu0 0.0
  %528 = vmatpush1.msra.mxu0 0.0
  %529 = vmatprep.subr.mxu0 0.0
  %530 = vmatpush1.msra.mxu0 0.0
  %531 = vmatprep.subr.mxu0 0.0
  %532 = vmatpush1.msra.mxu0 0.0
  %533 = vmatprep.subr.mxu0 0.0
  %534 = vmatpush1.msra.mxu0 0.0
  %535 = vmatprep.subr.mxu0 0.0
  %536 = vmatpush1.msra.mxu0 0.0
  %537 = vmatprep.subr.mxu0 0.0
  %538 = vmatpush1.msra.mxu0 0.0
  %539 = vmatprep.subr.mxu0 0.0
  %540 = vmatpush1.msra.mxu0 0.0
  %541 = vmatprep.subr.mxu0 0.0
  %542 = vmatpush1.msra.mxu0 0.0
  %543 = vmatprep.subr.mxu0 0.0
  %544 = vmatpush1.msra.mxu0 0.0
  %545 = vmatprep.subr.mxu0 0.0
  %546 = vmatpush1.msra.mxu0 0.0
  %547 = vmatprep.subr.mxu0 0.0
  %548 = vmatpush1.msra.mxu0 0.0
  %549 = vmatprep.subr.mxu0 0.0
  %550 = vmatpush1.msra.mxu0 0.0
  %551 = vmatprep.subr.mxu0 0.0
  %552 = vmatpush1.msra.mxu0 0.0
  %553 = vmatprep.subr.mxu0 0.0
  %554 = vmatpush1.msra.mxu0 0.0
  %555 = vmatprep.subr.mxu0 0.0
  %556 = vmatpush1.msra.mxu0 0.0
  %557 = vmatprep.mubr.f32.mxu0 0.0
  %558 = vmatmul.mubr.f32.gmra.mrb[0].mxu0 %v491
  %v559 = vpop.f32.mrb[0].mxu0
  %v560 = vadd.f32 0.0, %v559
  %v561 = vpop.f32.mrb[0].mxu0
  %562 = vdwg.mxu0
  %v563 = vadd.f32 %v162, %v560
  %v564 = vxor.u32 %v563, 2147483648
  %v565 = vmul.f32 %v564, 1.442695
  %v566 = vpow.pop %v565
  %v567 = vadd.f32 %v566, 1.0
  %v568 = vrcp.pop %v567
  %v569 = vmul.f32 1.0, %v568
  %v570 = vtanh.pop %v563
  %v571 = vmul.f32 %v569, %v481
  %573 = vrot.lane.b32.xlu0 %v570, 64
  %v574 = vpop.permute.xlu0 %573
  %v576 = vmul.f32 %v569, %v574
  %578 = vrot.lane.b32.xlu0 %v576, 32
  %v579 = vpop.permute.xlu0 %578
  %v581 = vadd.f32 %v571, %v579
  %v582 = vtanh.pop %v581
  %584 = vrot.lane.b32.xlu0 %v582, 64
  %v585 = vpop.permute.xlu0 %584
  %v587 = vmul.f32 %v569, %v585
  %589 = vrot.lane.b32.xlu0 %v587, 32
  %v590 = vpop.permute.xlu0 %589
  %v591 = vsel %vm189, %v590, 0
  %593 = vmatprep.subr.mxu0 0.0
  %594 = vmatpush1.msra.mxu0 %v185
  %595 = vmatprep.subr.mxu0 0.0
  %596 = vmatpush1.msra.mxu0 %v186
  %597 = vmatprep.subr.mxu0 0.0
  %598 = vmatpush1.msra.mxu0 %v187
  %599 = vmatprep.subr.mxu0 0.0
  %600 = vmatpush1.msra.mxu0 %v188
  %601 = vmatprep.subr.mxu0 0.0
  %602 = vmatpush1.msra.mxu0 0.0
  %603 = vmatprep.subr.mxu0 0.0
  %604 = vmatpush1.msra.mxu0 0.0
  %605 = vmatprep.subr.mxu0 0.0
  %606 = vmatpush1.msra.mxu0 0.0
  %607 = vmatprep.subr.mxu0 0.0
  %608 = vmatpush1.msra.mxu0 0.0
  %609 = vmatprep.subr.mxu0 0.0
  %610 = vmatpush1.msra.mxu0 0.0
  %611 = vmatprep.subr.mxu0 0.0
  %612 = vmatpush1.msra.mxu0 0.0
  %613 = vmatprep.subr.mxu0 0.0
  %614 = vmatpush1.msra.mxu0 0.0
  %615 = vmatprep.subr.mxu0 0.0
  %616 = vmatpush1.msra.mxu0 0.0
  %617 = vmatprep.subr.mxu0 0.0
  %618 = vmatpush1.msra.mxu0 0.0
  %619 = vmatprep.subr.mxu0 0.0
  %620 = vmatpush1.msra.mxu0 0.0
  %621 = vmatprep.subr.mxu0 0.0
  %622 = vmatpush1.msra.mxu0 0.0
  %623 = vmatprep.subr.mxu0 0.0
  %624 = vmatpush1.msra.mxu0 0.0
  %625 = vmatprep.subr.mxu0 0.0
  %626 = vmatpush1.msra.mxu0 0.0
  %627 = vmatprep.subr.mxu0 0.0
  %628 = vmatpush1.msra.mxu0 0.0
  %629 = vmatprep.subr.mxu0 0.0
  %630 = vmatpush1.msra.mxu0 0.0
  %631 = vmatprep.subr.mxu0 0.0
  %632 = vmatpush1.msra.mxu0 0.0
  %633 = vmatprep.subr.mxu0 0.0
  %634 = vmatpush1.msra.mxu0 0.0
  %635 = vmatprep.subr.mxu0 0.0
  %636 = vmatpush1.msra.mxu0 0.0
  %637 = vmatprep.subr.mxu0 0.0
  %638 = vmatpush1.msra.mxu0 0.0
  %639 = vmatprep.subr.mxu0 0.0
  %640 = vmatpush1.msra.mxu0 0.0
  %641 = vmatprep.subr.mxu0 0.0
  %642 = vmatpush1.msra.mxu0 0.0
  %643 = vmatprep.subr.mxu0 0.0
  %644 = vmatpush1.msra.mxu0 0.0
  %645 = vmatprep.subr.mxu0 0.0
  %646 = vmatpush1.msra.mxu0 0.0
  %647 = vmatprep.subr.mxu0 0.0
  %648 = vmatpush1.msra.mxu0 0.0
  %649 = vmatprep.subr.mxu0 0.0
  %650 = vmatpush1.msra.mxu0 0.0
  %651 = vmatprep.subr.mxu0 0.0
  %652 = vmatpush1.msra.mxu0 0.0
  %653 = vmatprep.subr.mxu0 0.0
  %654 = vmatpush1.msra.mxu0 0.0
  %655 = vmatprep.subr.mxu0 0.0
  %656 = vmatpush1.msra.mxu0 0.0
  %657 = vmatprep.mubr.f32.mxu0 0.0
  %658 = vmatmul.mubr.f32.gmra.mrb[0].mxu0 %v591
  %v659 = vpop.f32.mrb[0].mxu0
  %v660 = vadd.f32 0.0, %v659
  %v661 = vpop.f32.mrb[0].mxu0
  %662 = vdwg.mxu0
  %v663 = vadd.f32 %v167, %v660
  %v664 = vxor.u32 %v663, 2147483648
  %v665 = vmul.f32 %v664, 1.442695
  %v666 = vpow.pop %v665
  %v667 = vadd.f32 %v666, 1.0
  %v668 = vrcp.pop %v667
  %v669 = vmul.f32 1.0, %v668
  %v670 = vtanh.pop %v663
  %v671 = vmul.f32 %v669, %v581
  %673 = vrot.lane.b32.xlu0 %v670, 64
  %v674 = vpop.permute.xlu0 %673
  %v676 = vmul.f32 %v669, %v674
  %678 = vrot.lane.b32.xlu0 %v676, 32
  %v679 = vpop.permute.xlu0 %678
  %v681 = vadd.f32 %v671, %v679
  %v682 = vtanh.pop %v681
  %684 = vrot.lane.b32.xlu0 %v682, 64
  %v685 = vpop.permute.xlu0 %684
  %v687 = vmul.f32 %v669, %v685
  %689 = vrot.lane.b32.xlu0 %v687, 32
  %v690 = vpop.permute.xlu0 %689
  %v691 = vsel %vm189, %v690, 0
  %693 = vmatprep.subr.mxu0 0.0
  %694 = vmatpush1.msra.mxu0 %v185
  %695 = vmatprep.subr.mxu0 0.0
  %696 = vmatpush1.msra.mxu0 %v186
  %697 = vmatprep.subr.mxu0 0.0
  %698 = vmatpush1.msra.mxu0 %v187
  %699 = vmatprep.subr.mxu0 0.0
  %700 = vmatpush1.msra.mxu0 %v188
  %701 = vmatprep.subr.mxu0 0.0
  %702 = vmatpush1.msra.mxu0 0.0
  %703 = vmatprep.subr.mxu0 0.0
  %704 = vmatpush1.msra.mxu0 0.0
  %705 = vmatprep.subr.mxu0 0.0
  %706 = vmatpush1.msra.mxu0 0.0
  %707 = vmatprep.subr.mxu0 0.0
  %708 = vmatpush1.msra.mxu0 0.0
  %709 = vmatprep.subr.mxu0 0.0
  %710 = vmatpush1.msra.mxu0 0.0
  %711 = vmatprep.subr.mxu0 0.0
  %712 = vmatpush1.msra.mxu0 0.0
  %713 = vmatprep.subr.mxu0 0.0
  %714 = vmatpush1.msra.mxu0 0.0
  %715 = vmatprep.subr.mxu0 0.0
  %716 = vmatpush1.msra.mxu0 0.0
  %717 = vmatprep.subr.mxu0 0.0
  %718 = vmatpush1.msra.mxu0 0.0
  %719 = vmatprep.subr.mxu0 0.0
  %720 = vmatpush1.msra.mxu0 0.0
  %721 = vmatprep.subr.mxu0 0.0
  %722 = vmatpush1.msra.mxu0 0.0
  %723 = vmatprep.subr.mxu0 0.0
  %724 = vmatpush1.msra.mxu0 0.0
  %725 = vmatprep.subr.mxu0 0.0
  %726 = vmatpush1.msra.mxu0 0.0
  %727 = vmatprep.subr.mxu0 0.0
  %728 = vmatpush1.msra.mxu0 0.0
  %729 = vmatprep.subr.mxu0 0.0
  %730 = vmatpush1.msra.mxu0 0.0
  %731 = vmatprep.subr.mxu0 0.0
  %732 = vmatpush1.msra.mxu0 0.0
  %733 = vmatprep.subr.mxu0 0.0
  %734 = vmatpush1.msra.mxu0 0.0
  %735 = vmatprep.subr.mxu0 0.0
  %736 = vmatpush1.msra.mxu0 0.0
  %737 = vmatprep.subr.mxu0 0.0
  %738 = vmatpush1.msra.mxu0 0.0
  %739 = vmatprep.subr.mxu0 0.0
  %740 = vmatpush1.msra.mxu0 0.0
  %741 = vmatprep.subr.mxu0 0.0
  %742 = vmatpush1.msra.mxu0 0.0
  %743 = vmatprep.subr.mxu0 0.0
  %744 = vmatpush1.msra.mxu0 0.0
  %745 = vmatprep.subr.mxu0 0.0
  %746 = vmatpush1.msra.mxu0 0.0
  %747 = vmatprep.subr.mxu0 0.0
  %748 = vmatpush1.msra.mxu0 0.0
  %749 = vmatprep.subr.mxu0 0.0
  %750 = vmatpush1.msra.mxu0 0.0
  %751 = vmatprep.subr.mxu0 0.0
  %752 = vmatpush1.msra.mxu0 0.0
  %753 = vmatprep.subr.mxu0 0.0
  %754 = vmatpush1.msra.mxu0 0.0
  %755 = vmatprep.subr.mxu0 0.0
  %756 = vmatpush1.msra.mxu0 0.0
  %757 = vmatprep.mubr.f32.mxu0 0.0
  %758 = vmatmul.mubr.f32.gmra.mrb[0].mxu0 %v691
  %v759 = vpop.f32.mrb[0].mxu0
  %v760 = vadd.f32 0.0, %v759
  %v761 = vpop.f32.mrb[0].mxu0
  %762 = vdwg.mxu0
  %v763 = vadd.f32 %v172, %v760
  %v764 = vxor.u32 %v763, 2147483648
  %v765 = vmul.f32 %v764, 1.442695
  %v766 = vpow.pop %v765
  %v767 = vadd.f32 %v766, 1.0
  %v768 = vrcp.pop %v767
  %v769 = vmul.f32 1.0, %v768
  %v770 = vtanh.pop %v763
  %v771 = vmul.f32 %v769, %v681
  %773 = vrot.lane.b32.xlu0 %v770, 64
  %v774 = vpop.permute.xlu0 %773
  %v776 = vmul.f32 %v769, %v774
  %778 = vrot.lane.b32.xlu0 %v776, 32
  %v779 = vpop.permute.xlu0 %778
  %v781 = vadd.f32 %v771, %v779
  %v782 = vtanh.pop %v781
  %784 = vrot.lane.b32.xlu0 %v782, 64
  %v785 = vpop.permute.xlu0 %784
  %v787 = vmul.f32 %v769, %v785
  %789 = vrot.lane.b32.xlu0 %v787, 32
  %v790 = vpop.permute.xlu0 %789
  %v791 = vsel %vm189, %v790, 0
  %793 = vmatprep.subr.mxu0 0.0
  %794 = vmatpush1.msra.mxu0 %v185
  %795 = vmatprep.subr.mxu0 0.0
  %796 = vmatpush1.msra.mxu0 %v186
  %797 = vmatprep.subr.mxu0 0.0
  %798 = vmatpush1.msra.mxu0 %v187
  %799 = vmatprep.subr.mxu0 0.0
  %800 = vmatpush1.msra.mxu0 %v188
  %801 = vmatprep.subr.mxu0 0.0
  %802 = vmatpush1.msra.mxu0 0.0
  %803 = vmatprep.subr.mxu0 0.0
  %804 = vmatpush1.msra.mxu0 0.0
  %805 = vmatprep.subr.mxu0 0.0
  %806 = vmatpush1.msra.mxu0 0.0
  %807 = vmatprep.subr.mxu0 0.0
  %808 = vmatpush1.msra.mxu0 0.0
  %809 = vmatprep.subr.mxu0 0.0
  %810 = vmatpush1.msra.mxu0 0.0
  %811 = vmatprep.subr.mxu0 0.0
  %812 = vmatpush1.msra.mxu0 0.0
  %813 = vmatprep.subr.mxu0 0.0
  %814 = vmatpush1.msra.mxu0 0.0
  %815 = vmatprep.subr.mxu0 0.0
  %816 = vmatpush1.msra.mxu0 0.0
  %817 = vmatprep.subr.mxu0 0.0
  %818 = vmatpush1.msra.mxu0 0.0
  %819 = vmatprep.subr.mxu0 0.0
  %820 = vmatpush1.msra.mxu0 0.0
  %821 = vmatprep.subr.mxu0 0.0
  %822 = vmatpush1.msra.mxu0 0.0
  %823 = vmatprep.subr.mxu0 0.0
  %824 = vmatpush1.msra.mxu0 0.0
  %825 = vmatprep.subr.mxu0 0.0
  %826 = vmatpush1.msra.mxu0 0.0
  %827 = vmatprep.subr.mxu0 0.0
  %828 = vmatpush1.msra.mxu0 0.0
  %829 = vmatprep.subr.mxu0 0.0
  %830 = vmatpush1.msra.mxu0 0.0
  %831 = vmatprep.subr.mxu0 0.0
  %832 = vmatpush1.msra.mxu0 0.0
  %833 = vmatprep.subr.mxu0 0.0
  %834 = vmatpush1.msra.mxu0 0.0
  %835 = vmatprep.subr.mxu0 0.0
  %836 = vmatpush1.msra.mxu0 0.0
  %837 = vmatprep.subr.mxu0 0.0
  %838 = vmatpush1.msra.mxu0 0.0
  %839 = vmatprep.subr.mxu0 0.0
  %840 = vmatpush1.msra.mxu0 0.0
  %841 = vmatprep.subr.mxu0 0.0
  %842 = vmatpush1.msra.mxu0 0.0
  %843 = vmatprep.subr.mxu0 0.0
  %844 = vmatpush1.msra.mxu0 0.0
  %845 = vmatprep.subr.mxu0 0.0
  %846 = vmatpush1.msra.mxu0 0.0
  %847 = vmatprep.subr.mxu0 0.0
  %848 = vmatpush1.msra.mxu0 0.0
  %849 = vmatprep.subr.mxu0 0.0
  %850 = vmatpush1.msra.mxu0 0.0
  %851 = vmatprep.subr.mxu0 0.0
  %852 = vmatpush1.msra.mxu0 0.0
  %853 = vmatprep.subr.mxu0 0.0
  %854 = vmatpush1.msra.mxu0 0.0
  %855 = vmatprep.subr.mxu0 0.0
  %856 = vmatpush1.msra.mxu0 0.0
  %857 = vmatprep.mubr.f32.mxu0 0.0
  %858 = vmatmul.mubr.f32.gmra.mrb[0].mxu0 %v791
  %v859 = vpop.f32.mrb[0].mxu0
  %v860 = vadd.f32 0.0, %v859
  %v861 = vpop.f32.mrb[0].mxu0
  %862 = vdwg.mxu0
  %v863 = vadd.f32 %v177, %v860
  %v864 = vxor.u32 %v863, 2147483648
  %v865 = vmul.f32 %v864, 1.442695
  %v866 = vpow.pop %v865
  %v867 = vadd.f32 %v866, 1.0
  %v868 = vrcp.pop %v867
  %v869 = vmul.f32 1.0, %v868
  %v870 = vtanh.pop %v863
  %v871 = vmul.f32 %v869, %v781
  %873 = vrot.lane.b32.xlu0 %v870, 64
  %v874 = vpop.permute.xlu0 %873
  %v876 = vmul.f32 %v869, %v874
  %878 = vrot.lane.b32.xlu0 %v876, 32
  %v879 = vpop.permute.xlu0 %878
  %v881 = vadd.f32 %v871, %v879
  %v882 = vtanh.pop %v881
  %884 = vrot.lane.b32.xlu0 %v882, 64
  %v885 = vpop.permute.xlu0 %884
  %v887 = vmul.f32 %v869, %v885
  %889 = vrot.lane.b32.xlu0 %v887, 32
  %v890 = vpop.permute.xlu0 %889
  %v891 = vsel %vm189, %v890, 0
  %893 = vmatprep.subr.mxu0 0.0
  %894 = vmatpush1.msra.mxu0 %v185
  %895 = vmatprep.subr.mxu0 0.0
  %896 = vmatpush1.msra.mxu0 %v186
  %897 = vmatprep.subr.mxu0 0.0
  %898 = vmatpush1.msra.mxu0 %v187
  %899 = vmatprep.subr.mxu0 0.0
  %900 = vmatpush1.msra.mxu0 %v188
  %901 = vmatprep.subr.mxu0 0.0
  %902 = vmatpush1.msra.mxu0 0.0
  %903 = vmatprep.subr.mxu0 0.0
  %904 = vmatpush1.msra.mxu0 0.0
  %905 = vmatprep.subr.mxu0 0.0
  %906 = vmatpush1.msra.mxu0 0.0
  %907 = vmatprep.subr.mxu0 0.0
  %908 = vmatpush1.msra.mxu0 0.0
  %909 = vmatprep.subr.mxu0 0.0
  %910 = vmatpush1.msra.mxu0 0.0
  %911 = vmatprep.subr.mxu0 0.0
  %912 = vmatpush1.msra.mxu0 0.0
  %913 = vmatprep.subr.mxu0 0.0
  %914 = vmatpush1.msra.mxu0 0.0
  %915 = vmatprep.subr.mxu0 0.0
  %916 = vmatpush1.msra.mxu0 0.0
  %917 = vmatprep.subr.mxu0 0.0
  %918 = vmatpush1.msra.mxu0 0.0
  %919 = vmatprep.subr.mxu0 0.0
  %920 = vmatpush1.msra.mxu0 0.0
  %921 = vmatprep.subr.mxu0 0.0
  %922 = vmatpush1.msra.mxu0 0.0
  %923 = vmatprep.subr.mxu0 0.0
  %924 = vmatpush1.msra.mxu0 0.0
  %925 = vmatprep.subr.mxu0 0.0
  %926 = vmatpush1.msra.mxu0 0.0
  %927 = vmatprep.subr.mxu0 0.0
  %928 = vmatpush1.msra.mxu0 0.0
  %929 = vmatprep.subr.mxu0 0.0
  %930 = vmatpush1.msra.mxu0 0.0
  %931 = vmatprep.subr.mxu0 0.0
  %932 = vmatpush1.msra.mxu0 0.0
  %933 = vmatprep.subr.mxu0 0.0
  %934 = vmatpush1.msra.mxu0 0.0
  %935 = vmatprep.subr.mxu0 0.0
  %936 = vmatpush1.msra.mxu0 0.0
  %937 = vmatprep.subr.mxu0 0.0
  %938 = vmatpush1.msra.mxu0 0.0
  %939 = vmatprep.subr.mxu0 0.0
  %940 = vmatpush1.msra.mxu0 0.0
  %941 = vmatprep.subr.mxu0 0.0
  %942 = vmatpush1.msra.mxu0 0.0
  %943 = vmatprep.subr.mxu0 0.0
  %944 = vmatpush1.msra.mxu0 0.0
  %945 = vmatprep.subr.mxu0 0.0
  %946 = vmatpush1.msra.mxu0 0.0
  %947 = vmatprep.subr.mxu0 0.0
  %948 = vmatpush1.msra.mxu0 0.0
  %949 = vmatprep.subr.mxu0 0.0
  %950 = vmatpush1.msra.mxu0 0.0
  %951 = vmatprep.subr.mxu0 0.0
  %952 = vmatpush1.msra.mxu0 0.0
  %953 = vmatprep.subr.mxu0 0.0
  %954 = vmatpush1.msra.mxu0 0.0
  %955 = vmatprep.subr.mxu0 0.0
  %956 = vmatpush1.msra.mxu0 0.0
  %957 = vmatprep.mubr.f32.mxu0 0.0
  %958 = vmatmul.mubr.f32.gmra.mrb[0].mxu0 %v891
  %v959 = vpop.f32.mrb[0].mxu0
  %v960 = vadd.f32 0.0, %v959
  %v961 = vpop.f32.mrb[0].mxu0
  %962 = vdwg.mxu0
  %v963 = vadd.f32 %v182, %v960
  %v964 = vxor.u32 %v963, 2147483648
  %v965 = vmul.f32 %v964, 1.442695
  %v966 = vpow.pop %v965
  %v967 = vadd.f32 %v966, 1.0
  %v968 = vrcp.pop %v967
  %v969 = vmul.f32 1.0, %v968
  %v970 = vtanh.pop %v963
  %v971 = vmul.f32 %v969, %v881
  %973 = vrot.lane.b32.xlu0 %v970, 64
  %v974 = vpop.permute.xlu0 %973
  %v976 = vmul.f32 %v969, %v974
  %978 = vrot.lane.b32.xlu0 %v976, 32
  %v979 = vpop.permute.xlu0 %978
  %v981 = vadd.f32 %v971, %v979
  %v982 = vtanh.pop %v981
  %984 = vrot.lane.b32.xlu0 %v982, 64
  %v985 = vpop.permute.xlu0 %984
  %v987 = vmul.f32 %v969, %v985
  %v988 = vld [vmem:[%s6] sm:$0xff]
  %v989 = vld [vmem:[%s6 + $0x8] sm:$0xff]
  %v990 = vld [vmem:[%s6 + $0x10] sm:$0xff]
  %v991 = vld [vmem:[%s6 + $0x18] sm:$0xff]
  %v992 = vld [vmem:[%s7] sm:$0x1]
  %v993 = vld [vmem:[%s8] sm:$0xff]
  %v994 = vld [vmem:[%s8 + $0x8] sm:$0xff]
  %v995 = vld [vmem:[%s8 + $0x10] sm:$0xff]
  %v996 = vld [vmem:[%s8 + $0x18] sm:$0xff]
  %v997 = vld [vmem:[%s9] sm:$0x1]
  %v998 = vld [vmem:[%s1] sm:$0xff]
  %v999 = vld [vmem:[%s1 + $0x8] sm:$0xff]
  %v1000 = vld [vmem:[%s1 + $0x10] sm:$0xff]
  %v1001 = vld [vmem:[%s1 + $0x18] sm:$0xff]
  %v1002 = vld [vmem:[%s1 + $0x20] sm:$0xff]
  %v1003 = vld [vmem:[%s1 + $0x28] sm:$0xff]
  %v1004 = vld [vmem:[%s5] sm:$0x3]
  %vm1005 = vcmask 15360
  %v1007 = vsel %vm1005, %v998, 0
  %v1010 = vsel %vm1005, %v999, 0
  %v1013 = vsel %vm1005, %v1000, 0
  %v1016 = vsel %vm1005, %v1001, 0
  %v1019 = vsel %vm1005, %v1002, 0
  %v1022 = vsel %vm1005, %v1003, 0
  %vm1024 = vcmask 1041408
  %v1026 = vsel %vm1024, %v1004, 0
  %1028 = vmatprep.subr.mxu0 0.0
  %1029 = vmatpush1.msra.mxu0 %v1026
  %1030 = vmatprep.subr.mxu0 0.0
  %1031 = vmatpush1.msra.mxu0 0.0
  %1032 = vmatprep.subr.mxu0 0.0
  %1033 = vmatpush1.msra.mxu0 0.0
  %1034 = vmatprep.subr.mxu0 0.0
  %1035 = vmatpush1.msra.mxu0 0.0
  %1036 = vmatprep.subr.mxu0 0.0
  %1037 = vmatpush1.msra.mxu0 0.0
  %1038 = vmatprep.subr.mxu0 0.0
  %1039 = vmatpush1.msra.mxu0 0.0
  %1040 = vmatprep.subr.mxu0 0.0
  %1041 = vmatpush1.msra.mxu0 0.0
  %1042 = vmatprep.subr.mxu0 0.0
  %1043 = vmatpush1.msra.mxu0 0.0
  %1044 = vmatprep.subr.mxu0 0.0
  %1045 = vmatpush1.msra.mxu0 0.0
  %1046 = vmatprep.subr.mxu0 0.0
  %1047 = vmatpush1.msra.mxu0 0.0
  %1048 = vmatprep.subr.mxu0 0.0
  %1049 = vmatpush1.msra.mxu0 0.0
  %1050 = vmatprep.subr.mxu0 0.0
  %1051 = vmatpush1.msra.mxu0 0.0
  %1052 = vmatprep.subr.mxu0 0.0
  %1053 = vmatpush1.msra.mxu0 0.0
  %1054 = vmatprep.subr.mxu0 0.0
  %1055 = vmatpush1.msra.mxu0 0.0
  %1056 = vmatprep.subr.mxu0 0.0
  %1057 = vmatpush1.msra.mxu0 0.0
  %1058 = vmatprep.subr.mxu0 0.0
  %1059 = vmatpush1.msra.mxu0 0.0
  %1060 = vmatprep.subr.mxu0 0.0
  %1061 = vmatpush1.msra.mxu0 0.0
  %1062 = vmatprep.subr.mxu0 0.0
  %1063 = vmatpush1.msra.mxu0 0.0
  %1064 = vmatprep.subr.mxu0 0.0
  %1065 = vmatpush1.msra.mxu0 0.0
  %1066 = vmatprep.subr.mxu0 0.0
  %1067 = vmatpush1.msra.mxu0 0.0
  %1068 = vmatprep.subr.mxu0 0.0
  %1069 = vmatpush1.msra.mxu0 0.0
  %1070 = vmatprep.subr.mxu0 0.0
  %1071 = vmatpush1.msra.mxu0 0.0
  %1072 = vmatprep.subr.mxu0 0.0
  %1073 = vmatpush1.msra.mxu0 0.0
  %1074 = vmatprep.subr.mxu0 0.0
  %1075 = vmatpush1.msra.mxu0 0.0
  %1076 = vmatprep.subr.mxu0 0.0
  %1077 = vmatpush1.msra.mxu0 0.0
  %1078 = vmatprep.subr.mxu0 0.0
  %1079 = vmatpush1.msra.mxu0 0.0
  %1080 = vmatprep.subr.mxu0 0.0
  %1081 = vmatpush1.msra.mxu0 0.0
  %1082 = vmatprep.subr.mxu0 0.0
  %1083 = vmatpush1.msra.mxu0 0.0
  %1084 = vmatprep.subr.mxu0 0.0
  %1085 = vmatpush1.msra.mxu0 0.0
  %1086 = vmatprep.subr.mxu0 0.0
  %1087 = vmatpush1.msra.mxu0 0.0
  %1088 = vmatprep.subr.mxu0 0.0
  %1089 = vmatpush1.msra.mxu0 0.0
  %1090 = vmatprep.subr.mxu0 0.0
  %1091 = vmatpush1.msra.mxu0 0.0
  %1092 = vmatprep.mubr.f32.mxu0 0.0
  %1093 = vmatmul.mubr.f32.gmra.mrb[0].mxu0 %v1007
  %v1094 = vpop.f32.mrb[0].mxu0
  %v1095 = vpop.f32.mrb[0].mxu0
  %1096 = vmatprep.mubr.f32.mxu0 0.0
  %1097 = vmatmul.mubr.f32.gmra.mrb[0].mxu0 %v1010
  %v1098 = vpop.f32.mrb[0].mxu0
  %v1099 = vadd.f32 0.0, %v1098
  %v1100 = vpop.f32.mrb[0].mxu0
  %1101 = vmatprep.mubr.f32.mxu0 0.0
  %1102 = vmatmul.mubr.f32.gmra.mrb[0].mxu0 %v1013
  %v1103 = vpop.f32.mrb[0].mxu0
  %v1104 = vadd.f32 0.0, %v1103
  %v1105 = vpop.f32.mrb[0].mxu0
  %1106 = vmatprep.mubr.f32.mxu0 0.0
  %1107 = vmatmul.mubr.f32.gmra.mrb[0].mxu0 %v1016
  %v1108 = vpop.f32.mrb[0].mxu0
  %v1109 = vadd.f32 0.0, %v1108
  %v1110 = vpop.f32.mrb[0].mxu0
  %1111 = vmatprep.mubr.f32.mxu0 0.0
  %1112 = vmatmul.mubr.f32.gmra.mrb[0].mxu0 %v1019
  %v1113 = vpop.f32.mrb[0].mxu0
  %v1114 = vadd.f32 0.0, %v1113
  %v1115 = vpop.f32.mrb[0].mxu0
  %1116 = vmatprep.mubr.f32.mxu0 0.0
  %1117 = vmatmul.mubr.f32.gmra.mrb[0].mxu0 %v1022
  %v1118 = vpop.f32.mrb[0].mxu0
  %v1119 = vadd.f32 0.0, %v1118
  %v1120 = vpop.f32.mrb[0].mxu0
  %1121 = vdwg.mxu0
  %v1123 = vlaneseq
  %v1124 = vshrl.u32 %v1123, 7
  %v1125 = vsub.s32 0, %v1124
  %v1126 = vrot.slane %v992, %v1125
  %1129 = vrot.lane.b32.xlu0 %v987, 32
  %v1130 = vpop.permute.xlu0 %1129
  %v1131 = vsel %vm189, %v1130, 0
  %1133 = vmatprep.subr.mxu0 0.0
  %1134 = vmatpush1.msra.mxu0 %v988
  %1135 = vmatprep.subr.mxu0 0.0
  %1136 = vmatpush1.msra.mxu0 %v989
  %1137 = vmatprep.subr.mxu0 0.0
  %1138 = vmatpush1.msra.mxu0 %v990
  %1139 = vmatprep.subr.mxu0 0.0
  %1140 = vmatpush1.msra.mxu0 %v991
  %1141 = vmatprep.subr.mxu0 0.0
  %1142 = vmatpush1.msra.mxu0 0.0
  %1143 = vmatprep.subr.mxu0 0.0
  %1144 = vmatpush1.msra.mxu0 0.0
  %1145 = vmatprep.subr.mxu0 0.0
  %1146 = vmatpush1.msra.mxu0 0.0
  %1147 = vmatprep.subr.mxu0 0.0
  %1148 = vmatpush1.msra.mxu0 0.0
  %1149 = vmatprep.subr.mxu0 0.0
  %1150 = vmatpush1.msra.mxu0 0.0
  %1151 = vmatprep.subr.mxu0 0.0
  %1152 = vmatpush1.msra.mxu0 0.0
  %1153 = vmatprep.subr.mxu0 0.0
  %1154 = vmatpush1.msra.mxu0 0.0
  %1155 = vmatprep.subr.mxu0 0.0
  %1156 = vmatpush1.msra.mxu0 0.0
  %1157 = vmatprep.subr.mxu0 0.0
  %1158 = vmatpush1.msra.mxu0 0.0
  %1159 = vmatprep.subr.mxu0 0.0
  %1160 = vmatpush1.msra.mxu0 0.0
  %1161 = vmatprep.subr.mxu0 0.0
  %1162 = vmatpush1.msra.mxu0 0.0
  %1163 = vmatprep.subr.mxu0 0.0
  %1164 = vmatpush1.msra.mxu0 0.0
  %1165 = vmatprep.subr.mxu0 0.0
  %1166 = vmatpush1.msra.mxu0 0.0
  %1167 = vmatprep.subr.mxu0 0.0
  %1168 = vmatpush1.msra.mxu0 0.0
  %1169 = vmatprep.subr.mxu0 0.0
  %1170 = vmatpush1.msra.mxu0 0.0
  %1171 = vmatprep.subr.mxu0 0.0
  %1172 = vmatpush1.msra.mxu0 0.0
  %1173 = vmatprep.subr.mxu0 0.0
  %1174 = vmatpush1.msra.mxu0 0.0
  %1175 = vmatprep.subr.mxu0 0.0
  %1176 = vmatpush1.msra.mxu0 0.0
  %1177 = vmatprep.subr.mxu0 0.0
  %1178 = vmatpush1.msra.mxu0 0.0
  %1179 = vmatprep.subr.mxu0 0.0
  %1180 = vmatpush1.msra.mxu0 0.0
  %1181 = vmatprep.subr.mxu0 0.0
  %1182 = vmatpush1.msra.mxu0 0.0
  %1183 = vmatprep.subr.mxu0 0.0
  %1184 = vmatpush1.msra.mxu0 0.0
  %1185 = vmatprep.subr.mxu0 0.0
  %1186 = vmatpush1.msra.mxu0 0.0
  %1187 = vmatprep.subr.mxu0 0.0
  %1188 = vmatpush1.msra.mxu0 0.0
  %1189 = vmatprep.subr.mxu0 0.0
  %1190 = vmatpush1.msra.mxu0 0.0
  %1191 = vmatprep.subr.mxu0 0.0
  %1192 = vmatpush1.msra.mxu0 0.0
  %1193 = vmatprep.subr.mxu0 0.0
  %1194 = vmatpush1.msra.mxu0 0.0
  %1195 = vmatprep.subr.mxu0 0.0
  %1196 = vmatpush1.msra.mxu0 0.0
  %1197 = vmatprep.mubr.f32.mxu0 0.0
  %1198 = vmatmul.mubr.f32.gmra.mrb[0].mxu0 %v1131
  %v1199 = vpop.f32.mrb[0].mxu0
  %v1200 = vadd.f32 %v1126, %v1199
  %v1201 = vpop.f32.mrb[0].mxu0
  %1202 = vdwg.mxu0
  %v1203 = vxor.u32 %v1200, 2147483648
  %v1204 = vmul.f32 %v1203, 1.442695
  %v1205 = vpow.pop %v1204
  %v1206 = vadd.f32 %v1205, 1.0
  %v1207 = vrcp.pop %v1206
  %v1208 = vmul.f32 1.0, %v1207
  %v1209 = vtanh.pop %v1200
  %v1210 = vmul.f32 %v1208, %v981
  %1212 = vrot.lane.b32.xlu0 %v1209, 64
  %v1213 = vpop.permute.xlu0 %1212
  %v1215 = vmul.f32 %v1208, %v1213
  %1217 = vrot.lane.b32.xlu0 %v1215, 32
  %v1218 = vpop.permute.xlu0 %1217
  %v1220 = vadd.f32 %v1210, %v1218
  %v1221 = vtanh.pop %v1220
  %1223 = vrot.lane.b32.xlu0 %v1221, 64
  %v1224 = vpop.permute.xlu0 %1223
  %v1226 = vmul.f32 %v1208, %v1224
  %v1228 = vlaneseq
  %v1229 = vshrl.u32 %v1228, 7
  %v1230 = vsub.s32 0, %v1229
  %v1231 = vrot.slane %v997, %v1230
  %1234 = vrot.lane.b32.xlu0 %v1226, 32
  %v1235 = vpop.permute.xlu0 %1234
  %v1236 = vsel %vm189, %v1235, 0
  %1238 = vmatprep.subr.mxu0 0.0
  %1239 = vmatpush1.msra.mxu0 %v993
  %1240 = vmatprep.subr.mxu0 0.0
  %1241 = vmatpush1.msra.mxu0 %v994
  %1242 = vmatprep.subr.mxu0 0.0
  %1243 = vmatpush1.msra.mxu0 %v995
  %1244 = vmatprep.subr.mxu0 0.0
  %1245 = vmatpush1.msra.mxu0 %v996
  %1246 = vmatprep.subr.mxu0 0.0
  %1247 = vmatpush1.msra.mxu0 0.0
  %1248 = vmatprep.subr.mxu0 0.0
  %1249 = vmatpush1.msra.mxu0 0.0
  %1250 = vmatprep.subr.mxu0 0.0
  %1251 = vmatpush1.msra.mxu0 0.0
  %1252 = vmatprep.subr.mxu0 0.0
  %1253 = vmatpush1.msra.mxu0 0.0
  %1254 = vmatprep.subr.mxu0 0.0
  %1255 = vmatpush1.msra.mxu0 0.0
  %1256 = vmatprep.subr.mxu0 0.0
  %1257 = vmatpush1.msra.mxu0 0.0
  %1258 = vmatprep.subr.mxu0 0.0
  %1259 = vmatpush1.msra.mxu0 0.0
  %1260 = vmatprep.subr.mxu0 0.0
  %1261 = vmatpush1.msra.mxu0 0.0
  %1262 = vmatprep.subr.mxu0 0.0
  %1263 = vmatpush1.msra.mxu0 0.0
  %1264 = vmatprep.subr.mxu0 0.0
  %1265 = vmatpush1.msra.mxu0 0.0
  %1266 = vmatprep.subr.mxu0 0.0
  %1267 = vmatpush1.msra.mxu0 0.0
  %1268 = vmatprep.subr.mxu0 0.0
  %1269 = vmatpush1.msra.mxu0 0.0
  %1270 = vmatprep.subr.mxu0 0.0
  %1271 = vmatpush1.msra.mxu0 0.0
  %1272 = vmatprep.subr.mxu0 0.0
  %1273 = vmatpush1.msra.mxu0 0.0
  %1274 = vmatprep.subr.mxu0 0.0
  %1275 = vmatpush1.msra.mxu0 0.0
  %1276 = vmatprep.subr.mxu0 0.0
  %1277 = vmatpush1.msra.mxu0 0.0
  %1278 = vmatprep.subr.mxu0 0.0
  %1279 = vmatpush1.msra.mxu0 0.0
  %1280 = vmatprep.subr.mxu0 0.0
  %1281 = vmatpush1.msra.mxu0 0.0
  %1282 = vmatprep.subr.mxu0 0.0
  %1283 = vmatpush1.msra.mxu0 0.0
  %1284 = vmatprep.subr.mxu0 0.0
  %1285 = vmatpush1.msra.mxu0 0.0
  %1286 = vmatprep.subr.mxu0 0.0
  %1287 = vmatpush1.msra.mxu0 0.0
  %1288 = vmatprep.subr.mxu0 0.0
  %1289 = vmatpush1.msra.mxu0 0.0
  %1290 = vmatprep.subr.mxu0 0.0
  %1291 = vmatpush1.msra.mxu0 0.0
  %1292 = vmatprep.subr.mxu0 0.0
  %1293 = vmatpush1.msra.mxu0 0.0
  %1294 = vmatprep.subr.mxu0 0.0
  %1295 = vmatpush1.msra.mxu0 0.0
  %1296 = vmatprep.subr.mxu0 0.0
  %1297 = vmatpush1.msra.mxu0 0.0
  %1298 = vmatprep.subr.mxu0 0.0
  %1299 = vmatpush1.msra.mxu0 0.0
  %1300 = vmatprep.subr.mxu0 0.0
  %1301 = vmatpush1.msra.mxu0 0.0
  %1302 = vmatprep.mubr.f32.mxu0 0.0
  %1303 = vmatmul.mubr.f32.gmra.mrb[0].mxu0 %v1236
  %v1304 = vpop.f32.mrb[0].mxu0
  %v1305 = vadd.f32 %v1231, %v1304
  %v1306 = vpop.f32.mrb[0].mxu0
  %1307 = vdwg.mxu0
  %1308 = vmatprep.subr.mxu0 0.0
  %1309 = vmatpush1.msra.mxu0 %v988
  %1310 = vmatprep.subr.mxu0 0.0
  %1311 = vmatpush1.msra.mxu0 %v989
  %1312 = vmatprep.subr.mxu0 0.0
  %1313 = vmatpush1.msra.mxu0 %v990
  %1314 = vmatprep.subr.mxu0 0.0
  %1315 = vmatpush1.msra.mxu0 %v991
  %1316 = vmatprep.subr.mxu0 0.0
  %1317 = vmatpush1.msra.mxu0 0.0
  %1318 = vmatprep.subr.mxu0 0.0
  %1319 = vmatpush1.msra.mxu0 0.0
  %1320 = vmatprep.subr.mxu0 0.0
  %1321 = vmatpush1.msra.mxu0 0.0
  %1322 = vmatprep.subr.mxu0 0.0
  %1323 = vmatpush1.msra.mxu0 0.0
  %1324 = vmatprep.subr.mxu0 0.0
  %1325 = vmatpush1.msra.mxu0 0.0
  %1326 = vmatprep.subr.mxu0 0.0
  %1327 = vmatpush1.msra.mxu0 0.0
  %1328 = vmatprep.subr.mxu0 0.0
  %1329 = vmatpush1.msra.mxu0 0.0
  %1330 = vmatprep.subr.mxu0 0.0
  %1331 = vmatpush1.msra.mxu0 0.0
  %1332 = vmatprep.subr.mxu0 0.0
  %1333 = vmatpush1.msra.mxu0 0.0
  %1334 = vmatprep.subr.mxu0 0.0
  %1335 = vmatpush1.msra.mxu0 0.0
  %1336 = vmatprep.subr.mxu0 0.0
  %1337 = vmatpush1.msra.mxu0 0.0
  %1338 = vmatprep.subr.mxu0 0.0
  %1339 = vmatpush1.msra.mxu0 0.0
  %1340 = vmatprep.subr.mxu0 0.0
  %1341 = vmatpush1.msra.mxu0 0.0
  %1342 = vmatprep.subr.mxu0 0.0
  %1343 = vmatpush1.msra.mxu0 0.0
  %1344 = vmatprep.subr.mxu0 0.0
  %1345 = vmatpush1.msra.mxu0 0.0
  %1346 = vmatprep.subr.mxu0 0.0
  %1347 = vmatpush1.msra.mxu0 0.0
  %1348 = vmatprep.subr.mxu0 0.0
  %1349 = vmatpush1.msra.mxu0 0.0
  %1350 = vmatprep.subr.mxu0 0.0
  %1351 = vmatpush1.msra.mxu0 0.0
  %1352 = vmatprep.subr.mxu0 0.0
  %1353 = vmatpush1.msra.mxu0 0.0
  %1354 = vmatprep.subr.mxu0 0.0
  %1355 = vmatpush1.msra.mxu0 0.0
  %1356 = vmatprep.subr.mxu0 0.0
  %1357 = vmatpush1.msra.mxu0 0.0
  %1358 = vmatprep.subr.mxu0 0.0
  %1359 = vmatpush1.msra.mxu0 0.0
  %1360 = vmatprep.subr.mxu0 0.0
  %1361 = vmatpush1.msra.mxu0 0.0
  %1362 = vmatprep.subr.mxu0 0.0
  %1363 = vmatpush1.msra.mxu0 0.0
  %1364 = vmatprep.subr.mxu0 0.0
  %1365 = vmatpush1.msra.mxu0 0.0
  %1366 = vmatprep.subr.mxu0 0.0
  %1367 = vmatpush1.msra.mxu0 0.0
  %1368 = vmatprep.subr.mxu0 0.0
  %1369 = vmatpush1.msra.mxu0 0.0
  %1370 = vmatprep.subr.mxu0 0.0
  %1371 = vmatpush1.msra.mxu0 0.0
  %1372 = vmatprep.mubr.f32.mxu0 0.0
  %1373 = vmatmul.mubr.f32.gmra.mrb[0].mxu0 %v1236
  %v1374 = vpop.f32.mrb[0].mxu0
  %v1375 = vadd.f32 %v1126, %v1374
  %v1376 = vpop.f32.mrb[0].mxu0
  %1377 = vdwg.mxu0
  %v1378 = vadd.f32 %v1375, %v1099
  %v1379 = vxor.u32 %v1378, 2147483648
  %v1380 = vmul.f32 %v1379, 1.442695
  %v1381 = vpow.pop %v1380
  %v1382 = vadd.f32 %v1381, 1.0
  %v1383 = vrcp.pop %v1382
  %v1384 = vmul.f32 1.0, %v1383
  %v1385 = vtanh.pop %v1378
  %v1386 = vmul.f32 %v1384, %v1220
  %1388 = vrot.lane.b32.xlu0 %v1385, 64
  %v1389 = vpop.permute.xlu0 %1388
  %v1391 = vmul.f32 %v1384, %v1389
  %1393 = vrot.lane.b32.xlu0 %v1391, 32
  %v1394 = vpop.permute.xlu0 %1393
  %v1396 = vadd.f32 %v1386, %v1394
  %v1397 = vtanh.pop %v1396
  %1399 = vrot.lane.b32.xlu0 %v1397, 64
  %v1400 = vpop.permute.xlu0 %1399
  %v1402 = vmul.f32 %v1384, %v1400
  %1404 = vrot.lane.b32.xlu0 %v1402, 32
  %v1405 = vpop.permute.xlu0 %1404
  %v1406 = vsel %vm189, %v1405, 0
  %1408 = vmatprep.subr.mxu0 0.0
  %1409 = vmatpush1.msra.mxu0 %v993
  %1410 = vmatprep.subr.mxu0 0.0
  %1411 = vmatpush1.msra.mxu0 %v994
  %1412 = vmatprep.subr.mxu0 0.0
  %1413 = vmatpush1.msra.mxu0 %v995
  %1414 = vmatprep.subr.mxu0 0.0
  %1415 = vmatpush1.msra.mxu0 %v996
  %1416 = vmatprep.subr.mxu0 0.0
  %1417 = vmatpush1.msra.mxu0 0.0
  %1418 = vmatprep.subr.mxu0 0.0
  %1419 = vmatpush1.msra.mxu0 0.0
  %1420 = vmatprep.subr.mxu0 0.0
  %1421 = vmatpush1.msra.mxu0 0.0
  %1422 = vmatprep.subr.mxu0 0.0
  %1423 = vmatpush1.msra.mxu0 0.0
  %1424 = vmatprep.subr.mxu0 0.0
  %1425 = vmatpush1.msra.mxu0 0.0
  %1426 = vmatprep.subr.mxu0 0.0
  %1427 = vmatpush1.msra.mxu0 0.0
  %1428 = vmatprep.subr.mxu0 0.0
  %1429 = vmatpush1.msra.mxu0 0.0
  %1430 = vmatprep.subr.mxu0 0.0
  %1431 = vmatpush1.msra.mxu0 0.0
  %1432 = vmatprep.subr.mxu0 0.0
  %1433 = vmatpush1.msra.mxu0 0.0
  %1434 = vmatprep.subr.mxu0 0.0
  %1435 = vmatpush1.msra.mxu0 0.0
  %1436 = vmatprep.subr.mxu0 0.0
  %1437 = vmatpush1.msra.mxu0 0.0
  %1438 = vmatprep.subr.mxu0 0.0
  %1439 = vmatpush1.msra.mxu0 0.0
  %1440 = vmatprep.subr.mxu0 0.0
  %1441 = vmatpush1.msra.mxu0 0.0
  %1442 = vmatprep.subr.mxu0 0.0
  %1443 = vmatpush1.msra.mxu0 0.0
  %1444 = vmatprep.subr.mxu0 0.0
  %1445 = vmatpush1.msra.mxu0 0.0
  %1446 = vmatprep.subr.mxu0 0.0
  %1447 = vmatpush1.msra.mxu0 0.0
  %1448 = vmatprep.subr.mxu0 0.0
  %1449 = vmatpush1.msra.mxu0 0.0
  %1450 = vmatprep.subr.mxu0 0.0
  %1451 = vmatpush1.msra.mxu0 0.0
  %1452 = vmatprep.subr.mxu0 0.0
  %1453 = vmatpush1.msra.mxu0 0.0
  %1454 = vmatprep.subr.mxu0 0.0
  %1455 = vmatpush1.msra.mxu0 0.0
  %1456 = vmatprep.subr.mxu0 0.0
  %1457 = vmatpush1.msra.mxu0 0.0
  %1458 = vmatprep.subr.mxu0 0.0
  %1459 = vmatpush1.msra.mxu0 0.0
  %1460 = vmatprep.subr.mxu0 0.0
  %1461 = vmatpush1.msra.mxu0 0.0
  %1462 = vmatprep.subr.mxu0 0.0
  %1463 = vmatpush1.msra.mxu0 0.0
  %1464 = vmatprep.subr.mxu0 0.0
  %1465 = vmatpush1.msra.mxu0 0.0
  %1466 = vmatprep.subr.mxu0 0.0
  %1467 = vmatpush1.msra.mxu0 0.0
  %1468 = vmatprep.subr.mxu0 0.0
  %1469 = vmatpush1.msra.mxu0 0.0
  %1470 = vmatprep.subr.mxu0 0.0
  %1471 = vmatpush1.msra.mxu0 0.0
  %1472 = vmatprep.mubr.f32.mxu0 0.0
  %1473 = vmatmul.mubr.f32.gmra.mrb[0].mxu0 %v1406
  %v1474 = vpop.f32.mrb[0].mxu0
  %v1475 = vadd.f32 %v1231, %v1474
  %v1476 = vpop.f32.mrb[0].mxu0
  %1477 = vdwg.mxu0
  %1478 = vmatprep.subr.mxu0 0.0
  %1479 = vmatpush1.msra.mxu0 %v988
  %1480 = vmatprep.subr.mxu0 0.0
  %1481 = vmatpush1.msra.mxu0 %v989
  %1482 = vmatprep.subr.mxu0 0.0
  %1483 = vmatpush1.msra.mxu0 %v990
  %1484 = vmatprep.subr.mxu0 0.0
  %1485 = vmatpush1.msra.mxu0 %v991
  %1486 = vmatprep.subr.mxu0 0.0
  %1487 = vmatpush1.msra.mxu0 0.0
  %1488 = vmatprep.subr.mxu0 0.0
  %1489 = vmatpush1.msra.mxu0 0.0
  %1490 = vmatprep.subr.mxu0 0.0
  %1491 = vmatpush1.msra.mxu0 0.0
  %1492 = vmatprep.subr.mxu0 0.0
  %1493 = vmatpush1.msra.mxu0 0.0
  %1494 = vmatprep.subr.mxu0 0.0
  %1495 = vmatpush1.msra.mxu0 0.0
  %1496 = vmatprep.subr.mxu0 0.0
  %1497 = vmatpush1.msra.mxu0 0.0
  %1498 = vmatprep.subr.mxu0 0.0
  %1499 = vmatpush1.msra.mxu0 0.0
  %1500 = vmatprep.subr.mxu0 0.0
  %1501 = vmatpush1.msra.mxu0 0.0
  %1502 = vmatprep.subr.mxu0 0.0
  %1503 = vmatpush1.msra.mxu0 0.0
  %1504 = vmatprep.subr.mxu0 0.0
  %1505 = vmatpush1.msra.mxu0 0.0
  %1506 = vmatprep.subr.mxu0 0.0
  %1507 = vmatpush1.msra.mxu0 0.0
  %1508 = vmatprep.subr.mxu0 0.0
  %1509 = vmatpush1.msra.mxu0 0.0
  %1510 = vmatprep.subr.mxu0 0.0
  %1511 = vmatpush1.msra.mxu0 0.0
  %1512 = vmatprep.subr.mxu0 0.0
  %1513 = vmatpush1.msra.mxu0 0.0
  %1514 = vmatprep.subr.mxu0 0.0
  %1515 = vmatpush1.msra.mxu0 0.0
  %1516 = vmatprep.subr.mxu0 0.0
  %1517 = vmatpush1.msra.mxu0 0.0
  %1518 = vmatprep.subr.mxu0 0.0
  %1519 = vmatpush1.msra.mxu0 0.0
  %1520 = vmatprep.subr.mxu0 0.0
  %1521 = vmatpush1.msra.mxu0 0.0
  %1522 = vmatprep.subr.mxu0 0.0
  %1523 = vmatpush1.msra.mxu0 0.0
  %1524 = vmatprep.subr.mxu0 0.0
  %1525 = vmatpush1.msra.mxu0 0.0
  %1526 = vmatprep.subr.mxu0 0.0
  %1527 = vmatpush1.msra.mxu0 0.0
  %1528 = vmatprep.subr.mxu0 0.0
  %1529 = vmatpush1.msra.mxu0 0.0
  %1530 = vmatprep.subr.mxu0 0.0
  %1531 = vmatpush1.msra.mxu0 0.0
  %1532 = vmatprep.subr.mxu0 0.0
  %1533 = vmatpush1.msra.mxu0 0.0
  %1534 = vmatprep.subr.mxu0 0.0
  %1535 = vmatpush1.msra.mxu0 0.0
  %1536 = vmatprep.subr.mxu0 0.0
  %1537 = vmatpush1.msra.mxu0 0.0
  %1538 = vmatprep.subr.mxu0 0.0
  %1539 = vmatpush1.msra.mxu0 0.0
  %1540 = vmatprep.subr.mxu0 0.0
  %1541 = vmatpush1.msra.mxu0 0.0
  %1542 = vmatprep.mubr.f32.mxu0 0.0
  %1543 = vmatmul.mubr.f32.gmra.mrb[0].mxu0 %v1406
  %v1544 = vpop.f32.mrb[0].mxu0
  %v1545 = vadd.f32 %v1126, %v1544
  %v1546 = vpop.f32.mrb[0].mxu0
  %1547 = vdwg.mxu0
  %v1548 = vadd.f32 %v1545, %v1104
  %v1549 = vxor.u32 %v1548, 2147483648
  %v1550 = vmul.f32 %v1549, 1.442695
  %v1551 = vpow.pop %v1550
  %v1552 = vadd.f32 %v1551, 1.0
  %v1553 = vrcp.pop %v1552
  %v1554 = vmul.f32 1.0, %v1553
  %v1555 = vtanh.pop %v1548
  %v1556 = vmul.f32 %v1554, %v1396
  %1558 = vrot.lane.b32.xlu0 %v1555, 64
  %v1559 = vpop.permute.xlu0 %1558
  %v1561 = vmul.f32 %v1554, %v1559
  %1563 = vrot.lane.b32.xlu0 %v1561, 32
  %v1564 = vpop.permute.xlu0 %1563
  %v1566 = vadd.f32 %v1556, %v1564
  %v1567 = vtanh.pop %v1566
  %1569 = vrot.lane.b32.xlu0 %v1567, 64
  %v1570 = vpop.permute.xlu0 %1569
  %v1572 = vmul.f32 %v1554, %v1570
  %1574 = vrot.lane.b32.xlu0 %v1572, 32
  %v1575 = vpop.permute.xlu0 %1574
  %v1576 = vsel %vm189, %v1575, 0
  %1578 = vmatprep.subr.mxu0 0.0
  %1579 = vmatpush1.msra.mxu0 %v993
  %1580 = vmatprep.subr.mxu0 0.0
  %1581 = vmatpush1.msra.mxu0 %v994
  %1582 = vmatprep.subr.mxu0 0.0
  %1583 = vmatpush1.msra.mxu0 %v995
  %1584 = vmatprep.subr.mxu0 0.0
  %1585 = vmatpush1.msra.mxu0 %v996
  %1586 = vmatprep.subr.mxu0 0.0
  %1587 = vmatpush1.msra.mxu0 0.0
  %1588 = vmatprep.subr.mxu0 0.0
  %1589 = vmatpush1.msra.mxu0 0.0
  %1590 = vmatprep.subr.mxu0 0.0
  %1591 = vmatpush1.msra.mxu0 0.0
  %1592 = vmatprep.subr.mxu0 0.0
  %1593 = vmatpush1.msra.mxu0 0.0
  %1594 = vmatprep.subr.mxu0 0.0
  %1595 = vmatpush1.msra.mxu0 0.0
  %1596 = vmatprep.subr.mxu0 0.0
  %1597 = vmatpush1.msra.mxu0 0.0
  %1598 = vmatprep.subr.mxu0 0.0
  %1599 = vmatpush1.msra.mxu0 0.0
  %1600 = vmatprep.subr.mxu0 0.0
  %1601 = vmatpush1.msra.mxu0 0.0
  %1602 = vmatprep.subr.mxu0 0.0
  %1603 = vmatpush1.msra.mxu0 0.0
  %1604 = vmatprep.subr.mxu0 0.0
  %1605 = vmatpush1.msra.mxu0 0.0
  %1606 = vmatprep.subr.mxu0 0.0
  %1607 = vmatpush1.msra.mxu0 0.0
  %1608 = vmatprep.subr.mxu0 0.0
  %1609 = vmatpush1.msra.mxu0 0.0
  %1610 = vmatprep.subr.mxu0 0.0
  %1611 = vmatpush1.msra.mxu0 0.0
  %1612 = vmatprep.subr.mxu0 0.0
  %1613 = vmatpush1.msra.mxu0 0.0
  %1614 = vmatprep.subr.mxu0 0.0
  %1615 = vmatpush1.msra.mxu0 0.0
  %1616 = vmatprep.subr.mxu0 0.0
  %1617 = vmatpush1.msra.mxu0 0.0
  %1618 = vmatprep.subr.mxu0 0.0
  %1619 = vmatpush1.msra.mxu0 0.0
  %1620 = vmatprep.subr.mxu0 0.0
  %1621 = vmatpush1.msra.mxu0 0.0
  %1622 = vmatprep.subr.mxu0 0.0
  %1623 = vmatpush1.msra.mxu0 0.0
  %1624 = vmatprep.subr.mxu0 0.0
  %1625 = vmatpush1.msra.mxu0 0.0
  %1626 = vmatprep.subr.mxu0 0.0
  %1627 = vmatpush1.msra.mxu0 0.0
  %1628 = vmatprep.subr.mxu0 0.0
  %1629 = vmatpush1.msra.mxu0 0.0
  %1630 = vmatprep.subr.mxu0 0.0
  %1631 = vmatpush1.msra.mxu0 0.0
  %1632 = vmatprep.subr.mxu0 0.0
  %1633 = vmatpush1.msra.mxu0 0.0
  %1634 = vmatprep.subr.mxu0 0.0
  %1635 = vmatpush1.msra.mxu0 0.0
  %1636 = vmatprep.subr.mxu0 0.0
  %1637 = vmatpush1.msra.mxu0 0.0
  %1638 = vmatprep.subr.mxu0 0.0
  %1639 = vmatpush1.msra.mxu0 0.0
  %1640 = vmatprep.subr.mxu0 0.0
  %1641 = vmatpush1.msra.mxu0 0.0
  %1642 = vmatprep.mubr.f32.mxu0 0.0
  %1643 = vmatmul.mubr.f32.gmra.mrb[0].mxu0 %v1576
  %v1644 = vpop.f32.mrb[0].mxu0
  %v1645 = vadd.f32 %v1231, %v1644
  %v1646 = vpop.f32.mrb[0].mxu0
  %1647 = vdwg.mxu0
  %1648 = vmatprep.subr.mxu0 0.0
  %1649 = vmatpush1.msra.mxu0 %v988
  %1650 = vmatprep.subr.mxu0 0.0
  %1651 = vmatpush1.msra.mxu0 %v989
  %1652 = vmatprep.subr.mxu0 0.0
  %1653 = vmatpush1.msra.mxu0 %v990
  %1654 = vmatprep.subr.mxu0 0.0
  %1655 = vmatpush1.msra.mxu0 %v991
  %1656 = vmatprep.subr.mxu0 0.0
  %1657 = vmatpush1.msra.mxu0 0.0
  %1658 = vmatprep.subr.mxu0 0.0
  %1659 = vmatpush1.msra.mxu0 0.0
  %1660 = vmatprep.subr.mxu0 0.0
  %1661 = vmatpush1.msra.mxu0 0.0
  %1662 = vmatprep.subr.mxu0 0.0
  %1663 = vmatpush1.msra.mxu0 0.0
  %1664 = vmatprep.subr.mxu0 0.0
  %1665 = vmatpush1.msra.mxu0 0.0
  %1666 = vmatprep.subr.mxu0 0.0
  %1667 = vmatpush1.msra.mxu0 0.0
  %1668 = vmatprep.subr.mxu0 0.0
  %1669 = vmatpush1.msra.mxu0 0.0
  %1670 = vmatprep.subr.mxu0 0.0
  %1671 = vmatpush1.msra.mxu0 0.0
  %1672 = vmatprep.subr.mxu0 0.0
  %1673 = vmatpush1.msra.mxu0 0.0
  %1674 = vmatprep.subr.mxu0 0.0
  %1675 = vmatpush1.msra.mxu0 0.0
  %1676 = vmatprep.subr.mxu0 0.0
  %1677 = vmatpush1.msra.mxu0 0.0
  %1678 = vmatprep.subr.mxu0 0.0
  %1679 = vmatpush1.msra.mxu0 0.0
  %1680 = vmatprep.subr.mxu0 0.0
  %1681 = vmatpush1.msra.mxu0 0.0
  %1682 = vmatprep.subr.mxu0 0.0
  %1683 = vmatpush1.msra.mxu0 0.0
  %1684 = vmatprep.subr.mxu0 0.0
  %1685 = vmatpush1.msra.mxu0 0.0
  %1686 = vmatprep.subr.mxu0 0.0
  %1687 = vmatpush1.msra.mxu0 0.0
  %1688 = vmatprep.subr.mxu0 0.0
  %1689 = vmatpush1.msra.mxu0 0.0
  %1690 = vmatprep.subr.mxu0 0.0
  %1691 = vmatpush1.msra.mxu0 0.0
  %1692 = vmatprep.subr.mxu0 0.0
  %1693 = vmatpush1.msra.mxu0 0.0
  %1694 = vmatprep.subr.mxu0 0.0
  %1695 = vmatpush1.msra.mxu0 0.0
  %1696 = vmatprep.subr.mxu0 0.0
  %1697 = vmatpush1.msra.mxu0 0.0
  %1698 = vmatprep.subr.mxu0 0.0
  %1699 = vmatpush1.msra.mxu0 0.0
  %1700 = vmatprep.subr.mxu0 0.0
  %1701 = vmatpush1.msra.mxu0 0.0
  %1702 = vmatprep.subr.mxu0 0.0
  %1703 = vmatpush1.msra.mxu0 0.0
  %1704 = vmatprep.subr.mxu0 0.0
  %1705 = vmatpush1.msra.mxu0 0.0
  %1706 = vmatprep.subr.mxu0 0.0
  %1707 = vmatpush1.msra.mxu0 0.0
  %1708 = vmatprep.subr.mxu0 0.0
  %1709 = vmatpush1.msra.mxu0 0.0
  %1710 = vmatprep.subr.mxu0 0.0
  %1711 = vmatpush1.msra.mxu0 0.0
  %1712 = vmatprep.mubr.f32.mxu0 0.0
  %1713 = vmatmul.mubr.f32.gmra.mrb[0].mxu0 %v1576
  %v1714 = vpop.f32.mrb[0].mxu0
  %v1715 = vadd.f32 %v1126, %v1714
  %v1716 = vpop.f32.mrb[0].mxu0
  %1717 = vdwg.mxu0
  %v1718 = vadd.f32 %v1715, %v1109
  %v1719 = vxor.u32 %v1718, 2147483648
  %v1720 = vmul.f32 %v1719, 1.442695
  %v1721 = vpow.pop %v1720
  %v1722 = vadd.f32 %v1721, 1.0
  %v1723 = vrcp.pop %v1722
  %v1724 = vmul.f32 1.0, %v1723
  %v1725 = vtanh.pop %v1718
  %v1726 = vmul.f32 %v1724, %v1566
  %1728 = vrot.lane.b32.xlu0 %v1725, 64
  %v1729 = vpop.permute.xlu0 %1728
  %v1731 = vmul.f32 %v1724, %v1729
  %1733 = vrot.lane.b32.xlu0 %v1731, 32
  %v1734 = vpop.permute.xlu0 %1733
  %v1736 = vadd.f32 %v1726, %v1734
  %v1737 = vtanh.pop %v1736
  %1739 = vrot.lane.b32.xlu0 %v1737, 64
  %v1740 = vpop.permute.xlu0 %1739
  %v1742 = vmul.f32 %v1724, %v1740
  %1744 = vrot.lane.b32.xlu0 %v1742, 32
  %v1745 = vpop.permute.xlu0 %1744
  %v1746 = vsel %vm189, %v1745, 0
  %1748 = vmatprep.subr.mxu0 0.0
  %1749 = vmatpush1.msra.mxu0 %v993
  %1750 = vmatprep.subr.mxu0 0.0
  %1751 = vmatpush1.msra.mxu0 %v994
  %1752 = vmatprep.subr.mxu0 0.0
  %1753 = vmatpush1.msra.mxu0 %v995
  %1754 = vmatprep.subr.mxu0 0.0
  %1755 = vmatpush1.msra.mxu0 %v996
  %1756 = vmatprep.subr.mxu0 0.0
  %1757 = vmatpush1.msra.mxu0 0.0
  %1758 = vmatprep.subr.mxu0 0.0
  %1759 = vmatpush1.msra.mxu0 0.0
  %1760 = vmatprep.subr.mxu0 0.0
  %1761 = vmatpush1.msra.mxu0 0.0
  %1762 = vmatprep.subr.mxu0 0.0
  %1763 = vmatpush1.msra.mxu0 0.0
  %1764 = vmatprep.subr.mxu0 0.0
  %1765 = vmatpush1.msra.mxu0 0.0
  %1766 = vmatprep.subr.mxu0 0.0
  %1767 = vmatpush1.msra.mxu0 0.0
  %1768 = vmatprep.subr.mxu0 0.0
  %1769 = vmatpush1.msra.mxu0 0.0
  %1770 = vmatprep.subr.mxu0 0.0
  %1771 = vmatpush1.msra.mxu0 0.0
  %1772 = vmatprep.subr.mxu0 0.0
  %1773 = vmatpush1.msra.mxu0 0.0
  %1774 = vmatprep.subr.mxu0 0.0
  %1775 = vmatpush1.msra.mxu0 0.0
  %1776 = vmatprep.subr.mxu0 0.0
  %1777 = vmatpush1.msra.mxu0 0.0
  %1778 = vmatprep.subr.mxu0 0.0
  %1779 = vmatpush1.msra.mxu0 0.0
  %1780 = vmatprep.subr.mxu0 0.0
  %1781 = vmatpush1.msra.mxu0 0.0
  %1782 = vmatprep.subr.mxu0 0.0
  %1783 = vmatpush1.msra.mxu0 0.0
  %1784 = vmatprep.subr.mxu0 0.0
  %1785 = vmatpush1.msra.mxu0 0.0
  %1786 = vmatprep.subr.mxu0 0.0
  %1787 = vmatpush1.msra.mxu0 0.0
  %1788 = vmatprep.subr.mxu0 0.0
  %1789 = vmatpush1.msra.mxu0 0.0
  %1790 = vmatprep.subr.mxu0 0.0
  %1791 = vmatpush1.msra.mxu0 0.0
  %1792 = vmatprep.subr.mxu0 0.0
  %1793 = vmatpush1.msra.mxu0 0.0
  %1794 = vmatprep.subr.mxu0 0.0
  %1795 = vmatpush1.msra.mxu0 0.0
  %1796 = vmatprep.subr.mxu0 0.0
  %1797 = vmatpush1.msra.mxu0 0.0
  %1798 = vmatprep.subr.mxu0 0.0
  %1799 = vmatpush1.msra.mxu0 0.0
  %1800 = vmatprep.subr.mxu0 0.0
  %1801 = vmatpush1.msra.mxu0 0.0
  %1802 = vmatprep.subr.mxu0 0.0
  %1803 = vmatpush1.msra.mxu0 0.0
  %1804 = vmatprep.subr.mxu0 0.0
  %1805 = vmatpush1.msra.mxu0 0.0
  %1806 = vmatprep.subr.mxu0 0.0
  %1807 = vmatpush1.msra.mxu0 0.0
  %1808 = vmatprep.subr.mxu0 0.0
  %1809 = vmatpush1.msra.mxu0 0.0
  %1810 = vmatprep.subr.mxu0 0.0
  %1811 = vmatpush1.msra.mxu0 0.0
  %1812 = vmatprep.mubr.f32.mxu0 0.0
  %1813 = vmatmul.mubr.f32.gmra.mrb[0].mxu0 %v1746
  %v1814 = vpop.f32.mrb[0].mxu0
  %v1815 = vadd.f32 %v1231, %v1814
  %v1816 = vpop.f32.mrb[0].mxu0
  %1817 = vdwg.mxu0
  %1818 = vmatprep.subr.mxu0 0.0
  %1819 = vmatpush1.msra.mxu0 %v988
  %1820 = vmatprep.subr.mxu0 0.0
  %1821 = vmatpush1.msra.mxu0 %v989
  %1822 = vmatprep.subr.mxu0 0.0
  %1823 = vmatpush1.msra.mxu0 %v990
  %1824 = vmatprep.subr.mxu0 0.0
  %1825 = vmatpush1.msra.mxu0 %v991
  %1826 = vmatprep.subr.mxu0 0.0
  %1827 = vmatpush1.msra.mxu0 0.0
  %1828 = vmatprep.subr.mxu0 0.0
  %1829 = vmatpush1.msra.mxu0 0.0
  %1830 = vmatprep.subr.mxu0 0.0
  %1831 = vmatpush1.msra.mxu0 0.0
  %1832 = vmatprep.subr.mxu0 0.0
  %1833 = vmatpush1.msra.mxu0 0.0
  %1834 = vmatprep.subr.mxu0 0.0
  %1835 = vmatpush1.msra.mxu0 0.0
  %1836 = vmatprep.subr.mxu0 0.0
  %1837 = vmatpush1.msra.mxu0 0.0
  %1838 = vmatprep.subr.mxu0 0.0
  %1839 = vmatpush1.msra.mxu0 0.0
  %1840 = vmatprep.subr.mxu0 0.0
  %1841 = vmatpush1.msra.mxu0 0.0
  %1842 = vmatprep.subr.mxu0 0.0
  %1843 = vmatpush1.msra.mxu0 0.0
  %1844 = vmatprep.subr.mxu0 0.0
  %1845 = vmatpush1.msra.mxu0 0.0
  %1846 = vmatprep.subr.mxu0 0.0
  %1847 = vmatpush1.msra.mxu0 0.0
  %1848 = vmatprep.subr.mxu0 0.0
  %1849 = vmatpush1.msra.mxu0 0.0
  %1850 = vmatprep.subr.mxu0 0.0
  %1851 = vmatpush1.msra.mxu0 0.0
  %1852 = vmatprep.subr.mxu0 0.0
  %1853 = vmatpush1.msra.mxu0 0.0
  %1854 = vmatprep.subr.mxu0 0.0
  %1855 = vmatpush1.msra.mxu0 0.0
  %1856 = vmatprep.subr.mxu0 0.0
  %1857 = vmatpush1.msra.mxu0 0.0
  %1858 = vmatprep.subr.mxu0 0.0
  %1859 = vmatpush1.msra.mxu0 0.0
  %1860 = vmatprep.subr.mxu0 0.0
  %1861 = vmatpush1.msra.mxu0 0.0
  %1862 = vmatprep.subr.mxu0 0.0
  %1863 = vmatpush1.msra.mxu0 0.0
  %1864 = vmatprep.subr.mxu0 0.0
  %1865 = vmatpush1.msra.mxu0 0.0
  %1866 = vmatprep.subr.mxu0 0.0
  %1867 = vmatpush1.msra.mxu0 0.0
  %1868 = vmatprep.subr.mxu0 0.0
  %1869 = vmatpush1.msra.mxu0 0.0
  %1870 = vmatprep.subr.mxu0 0.0
  %1871 = vmatpush1.msra.mxu0 0.0
  %1872 = vmatprep.subr.mxu0 0.0
  %1873 = vmatpush1.msra.mxu0 0.0
  %1874 = vmatprep.subr.mxu0 0.0
  %1875 = vmatpush1.msra.mxu0 0.0
  %1876 = vmatprep.subr.mxu0 0.0
  %1877 = vmatpush1.msra.mxu0 0.0
  %1878 = vmatprep.subr.mxu0 0.0
  %1879 = vmatpush1.msra.mxu0 0.0
  %1880 = vmatprep.subr.mxu0 0.0
  %1881 = vmatpush1.msra.mxu0 0.0
  %1882 = vmatprep.mubr.f32.mxu0 0.0
  %1883 = vmatmul.mubr.f32.gmra.mrb[0].mxu0 %v1746
  %v1884 = vpop.f32.mrb[0].mxu0
  %v1885 = vadd.f32 %v1126, %v1884
  %v1886 = vpop.f32.mrb[0].mxu0
  %1887 = vdwg.mxu0
  %v1888 = vadd.f32 %v1885, %v1114
  %v1889 = vxor.u32 %v1888, 2147483648
  %v1890 = vmul.f32 %v1889, 1.442695
  %v1891 = vpow.pop %v1890
  %v1892 = vadd.f32 %v1891, 1.0
  %v1893 = vrcp.pop %v1892
  %v1894 = vmul.f32 1.0, %v1893
  %v1895 = vtanh.pop %v1888
  %v1896 = vmul.f32 %v1894, %v1736
  %1898 = vrot.lane.b32.xlu0 %v1895, 64
  %v1899 = vpop.permute.xlu0 %1898
  %v1901 = vmul.f32 %v1894, %v1899
  %1903 = vrot.lane.b32.xlu0 %v1901, 32
  %v1904 = vpop.permute.xlu0 %1903
  %v1906 = vadd.f32 %v1896, %v1904
  %v1907 = vtanh.pop %v1906
  %1909 = vrot.lane.b32.xlu0 %v1907, 64
  %v1910 = vpop.permute.xlu0 %1909
  %v1912 = vmul.f32 %v1894, %v1910
  %1914 = vrot.lane.b32.xlu0 %v1912, 32
  %v1915 = vpop.permute.xlu0 %1914
  %v1916 = vsel %vm189, %v1915, 0
  %1918 = vmatprep.subr.mxu0 0.0
  %1919 = vmatpush1.msra.mxu0 %v993
  %1920 = vmatprep.subr.mxu0 0.0
  %1921 = vmatpush1.msra.mxu0 %v994
  %1922 = vmatprep.subr.mxu0 0.0
  %1923 = vmatpush1.msra.mxu0 %v995
  %1924 = vmatprep.subr.mxu0 0.0
  %1925 = vmatpush1.msra.mxu0 %v996
  %1926 = vmatprep.subr.mxu0 0.0
  %1927 = vmatpush1.msra.mxu0 0.0
  %1928 = vmatprep.subr.mxu0 0.0
  %1929 = vmatpush1.msra.mxu0 0.0
  %1930 = vmatprep.subr.mxu0 0.0
  %1931 = vmatpush1.msra.mxu0 0.0
  %1932 = vmatprep.subr.mxu0 0.0
  %1933 = vmatpush1.msra.mxu0 0.0
  %1934 = vmatprep.subr.mxu0 0.0
  %1935 = vmatpush1.msra.mxu0 0.0
  %1936 = vmatprep.subr.mxu0 0.0
  %1937 = vmatpush1.msra.mxu0 0.0
  %1938 = vmatprep.subr.mxu0 0.0
  %1939 = vmatpush1.msra.mxu0 0.0
  %1940 = vmatprep.subr.mxu0 0.0
  %1941 = vmatpush1.msra.mxu0 0.0
  %1942 = vmatprep.subr.mxu0 0.0
  %1943 = vmatpush1.msra.mxu0 0.0
  %1944 = vmatprep.subr.mxu0 0.0
  %1945 = vmatpush1.msra.mxu0 0.0
  %1946 = vmatprep.subr.mxu0 0.0
  %1947 = vmatpush1.msra.mxu0 0.0
  %1948 = vmatprep.subr.mxu0 0.0
  %1949 = vmatpush1.msra.mxu0 0.0
  %1950 = vmatprep.subr.mxu0 0.0
  %1951 = vmatpush1.msra.mxu0 0.0
  %1952 = vmatprep.subr.mxu0 0.0
  %1953 = vmatpush1.msra.mxu0 0.0
  %1954 = vmatprep.subr.mxu0 0.0
  %1955 = vmatpush1.msra.mxu0 0.0
  %1956 = vmatprep.subr.mxu0 0.0
  %1957 = vmatpush1.msra.mxu0 0.0
  %1958 = vmatprep.subr.mxu0 0.0
  %1959 = vmatpush1.msra.mxu0 0.0
  %1960 = vmatprep.subr.mxu0 0.0
  %1961 = vmatpush1.msra.mxu0 0.0
  %1962 = vmatprep.subr.mxu0 0.0
  %1963 = vmatpush1.msra.mxu0 0.0
  %1964 = vmatprep.subr.mxu0 0.0
  %1965 = vmatpush1.msra.mxu0 0.0
  %1966 = vmatprep.subr.mxu0 0.0
  %1967 = vmatpush1.msra.mxu0 0.0
  %1968 = vmatprep.subr.mxu0 0.0
  %1969 = vmatpush1.msra.mxu0 0.0
  %1970 = vmatprep.subr.mxu0 0.0
  %1971 = vmatpush1.msra.mxu0 0.0
  %1972 = vmatprep.subr.mxu0 0.0
  %1973 = vmatpush1.msra.mxu0 0.0
  %1974 = vmatprep.subr.mxu0 0.0
  %1975 = vmatpush1.msra.mxu0 0.0
  %1976 = vmatprep.subr.mxu0 0.0
  %1977 = vmatpush1.msra.mxu0 0.0
  %1978 = vmatprep.subr.mxu0 0.0
  %1979 = vmatpush1.msra.mxu0 0.0
  %1980 = vmatprep.subr.mxu0 0.0
  %1981 = vmatpush1.msra.mxu0 0.0
  %1982 = vmatprep.mubr.f32.mxu0 0.0
  %1983 = vmatmul.mubr.f32.gmra.mrb[0].mxu0 %v1916
  %v1984 = vpop.f32.mrb[0].mxu0
  %v1985 = vadd.f32 %v1231, %v1984
  %v1986 = vpop.f32.mrb[0].mxu0
  %1987 = vdwg.mxu0
  %1988 = vmatprep.subr.mxu0 0.0
  %1989 = vmatpush1.msra.mxu0 %v988
  %1990 = vmatprep.subr.mxu0 0.0
  %1991 = vmatpush1.msra.mxu0 %v989
  %1992 = vmatprep.subr.mxu0 0.0
  %1993 = vmatpush1.msra.mxu0 %v990
  %1994 = vmatprep.subr.mxu0 0.0
  %1995 = vmatpush1.msra.mxu0 %v991
  %1996 = vmatprep.subr.mxu0 0.0
  %1997 = vmatpush1.msra.mxu0 0.0
  %1998 = vmatprep.subr.mxu0 0.0
  %1999 = vmatpush1.msra.mxu0 0.0
  %2000 = vmatprep.subr.mxu0 0.0
  %2001 = vmatpush1.msra.mxu0 0.0
  %2002 = vmatprep.subr.mxu0 0.0
  %2003 = vmatpush1.msra.mxu0 0.0
  %2004 = vmatprep.subr.mxu0 0.0
  %2005 = vmatpush1.msra.mxu0 0.0
  %2006 = vmatprep.subr.mxu0 0.0
  %2007 = vmatpush1.msra.mxu0 0.0
  %2008 = vmatprep.subr.mxu0 0.0
  %2009 = vmatpush1.msra.mxu0 0.0
  %2010 = vmatprep.subr.mxu0 0.0
  %2011 = vmatpush1.msra.mxu0 0.0
  %2012 = vmatprep.subr.mxu0 0.0
  %2013 = vmatpush1.msra.mxu0 0.0
  %2014 = vmatprep.subr.mxu0 0.0
  %2015 = vmatpush1.msra.mxu0 0.0
  %2016 = vmatprep.subr.mxu0 0.0
  %2017 = vmatpush1.msra.mxu0 0.0
  %2018 = vmatprep.subr.mxu0 0.0
  %2019 = vmatpush1.msra.mxu0 0.0
  %2020 = vmatprep.subr.mxu0 0.0
  %2021 = vmatpush1.msra.mxu0 0.0
  %2022 = vmatprep.subr.mxu0 0.0
  %2023 = vmatpush1.msra.mxu0 0.0
  %2024 = vmatprep.subr.mxu0 0.0
  %2025 = vmatpush1.msra.mxu0 0.0
  %2026 = vmatprep.subr.mxu0 0.0
  %2027 = vmatpush1.msra.mxu0 0.0
  %2028 = vmatprep.subr.mxu0 0.0
  %2029 = vmatpush1.msra.mxu0 0.0
  %2030 = vmatprep.subr.mxu0 0.0
  %2031 = vmatpush1.msra.mxu0 0.0
  %2032 = vmatprep.subr.mxu0 0.0
  %2033 = vmatpush1.msra.mxu0 0.0
  %2034 = vmatprep.subr.mxu0 0.0
  %2035 = vmatpush1.msra.mxu0 0.0
  %2036 = vmatprep.subr.mxu0 0.0
  %2037 = vmatpush1.msra.mxu0 0.0
  %2038 = vmatprep.subr.mxu0 0.0
  %2039 = vmatpush1.msra.mxu0 0.0
  %2040 = vmatprep.subr.mxu0 0.0
  %2041 = vmatpush1.msra.mxu0 0.0
  %2042 = vmatprep.subr.mxu0 0.0
  %2043 = vmatpush1.msra.mxu0 0.0
  %2044 = vmatprep.subr.mxu0 0.0
  %2045 = vmatpush1.msra.mxu0 0.0
  %2046 = vmatprep.subr.mxu0 0.0
  %2047 = vmatpush1.msra.mxu0 0.0
  %2048 = vmatprep.subr.mxu0 0.0
  %2049 = vmatpush1.msra.mxu0 0.0
  %2050 = vmatprep.subr.mxu0 0.0
  %2051 = vmatpush1.msra.mxu0 0.0
  %2052 = vmatprep.mubr.f32.mxu0 0.0
  %2053 = vmatmul.mubr.f32.gmra.mrb[0].mxu0 %v1916
  %v2054 = vpop.f32.mrb[0].mxu0
  %v2055 = vadd.f32 %v1126, %v2054
  %v2056 = vpop.f32.mrb[0].mxu0
  %2057 = vdwg.mxu0
  %v2058 = vadd.f32 %v2055, %v1119
  %v2059 = vxor.u32 %v2058, 2147483648
  %v2060 = vmul.f32 %v2059, 1.442695
  %v2061 = vpow.pop %v2060
  %v2062 = vadd.f32 %v2061, 1.0
  %v2063 = vrcp.pop %v2062
  %v2064 = vmul.f32 1.0, %v2063
  %v2065 = vtanh.pop %v2058
  %v2066 = vmul.f32 %v2064, %v1906
  %2068 = vrot.lane.b32.xlu0 %v2065, 64
  %v2069 = vpop.permute.xlu0 %2068
  %v2071 = vmul.f32 %v2064, %v2069
  %2073 = vrot.lane.b32.xlu0 %v2071, 32
  %v2074 = vpop.permute.xlu0 %2073
  %v2076 = vadd.f32 %v2066, %v2074
  %v2077 = vtanh.pop %v2076
  %2079 = vrot.lane.b32.xlu0 %v2077, 64
  %v2080 = vpop.permute.xlu0 %2079
  %v2082 = vmul.f32 %v2064, %v2080
  %2084 = vrot.lane.b32.xlu0 %v2082, 32
  %v2085 = vpop.permute.xlu0 %2084
  %v2086 = vsel %vm189, %v2085, 0
  %2088 = vmatprep.subr.mxu0 0.0
  %2089 = vmatpush1.msra.mxu0 %v993
  %2090 = vmatprep.subr.mxu0 0.0
  %2091 = vmatpush1.msra.mxu0 %v994
  %2092 = vmatprep.subr.mxu0 0.0
  %2093 = vmatpush1.msra.mxu0 %v995
  %2094 = vmatprep.subr.mxu0 0.0
  %2095 = vmatpush1.msra.mxu0 %v996
  %2096 = vmatprep.subr.mxu0 0.0
  %2097 = vmatpush1.msra.mxu0 0.0
  %2098 = vmatprep.subr.mxu0 0.0
  %2099 = vmatpush1.msra.mxu0 0.0
  %2100 = vmatprep.subr.mxu0 0.0
  %2101 = vmatpush1.msra.mxu0 0.0
  %2102 = vmatprep.subr.mxu0 0.0
  %2103 = vmatpush1.msra.mxu0 0.0
  %2104 = vmatprep.subr.mxu0 0.0
  %2105 = vmatpush1.msra.mxu0 0.0
  %2106 = vmatprep.subr.mxu0 0.0
  %2107 = vmatpush1.msra.mxu0 0.0
  %2108 = vmatprep.subr.mxu0 0.0
  %2109 = vmatpush1.msra.mxu0 0.0
  %2110 = vmatprep.subr.mxu0 0.0
  %2111 = vmatpush1.msra.mxu0 0.0
  %2112 = vmatprep.subr.mxu0 0.0
  %2113 = vmatpush1.msra.mxu0 0.0
  %2114 = vmatprep.subr.mxu0 0.0
  %2115 = vmatpush1.msra.mxu0 0.0
  %2116 = vmatprep.subr.mxu0 0.0
  %2117 = vmatpush1.msra.mxu0 0.0
  %2118 = vmatprep.subr.mxu0 0.0
  %2119 = vmatpush1.msra.mxu0 0.0
  %2120 = vmatprep.subr.mxu0 0.0
  %2121 = vmatpush1.msra.mxu0 0.0
  %2122 = vmatprep.subr.mxu0 0.0
  %2123 = vmatpush1.msra.mxu0 0.0
  %2124 = vmatprep.subr.mxu0 0.0
  %2125 = vmatpush1.msra.mxu0 0.0
  %2126 = vmatprep.subr.mxu0 0.0
  %2127 = vmatpush1.msra.mxu0 0.0
  %2128 = vmatprep.subr.mxu0 0.0
  %2129 = vmatpush1.msra.mxu0 0.0
  %2130 = vmatprep.subr.mxu0 0.0
  %2131 = vmatpush1.msra.mxu0 0.0
  %2132 = vmatprep.subr.mxu0 0.0
  %2133 = vmatpush1.msra.mxu0 0.0
  %2134 = vmatprep.subr.mxu0 0.0
  %2135 = vmatpush1.msra.mxu0 0.0
  %2136 = vmatprep.subr.mxu0 0.0
  %2137 = vmatpush1.msra.mxu0 0.0
  %2138 = vmatprep.subr.mxu0 0.0
  %2139 = vmatpush1.msra.mxu0 0.0
  %2140 = vmatprep.subr.mxu0 0.0
  %2141 = vmatpush1.msra.mxu0 0.0
  %2142 = vmatprep.subr.mxu0 0.0
  %2143 = vmatpush1.msra.mxu0 0.0
  %2144 = vmatprep.subr.mxu0 0.0
  %2145 = vmatpush1.msra.mxu0 0.0
  %2146 = vmatprep.subr.mxu0 0.0
  %2147 = vmatpush1.msra.mxu0 0.0
  %2148 = vmatprep.subr.mxu0 0.0
  %2149 = vmatpush1.msra.mxu0 0.0
  %2150 = vmatprep.subr.mxu0 0.0
  %2151 = vmatpush1.msra.mxu0 0.0
  %2152 = vmatprep.mubr.f32.mxu0 0.0
  %2153 = vmatmul.mubr.f32.gmra.mrb[0].mxu0 %v2086
  %v2154 = vpop.f32.mrb[0].mxu0
  %v2155 = vadd.f32 %v1231, %v2154
  %v2156 = vpop.f32.mrb[0].mxu0
  %2157 = vdwg.mxu0
  %2158 = vst.msk [vmem:[%s10] sm:$0xff] %vm1005, %v1305
  %2159 = vst.msk [vmem:[%s10 + $0x8] sm:$0xff] %vm1005, %v1475
  %2160 = vst.msk [vmem:[%s10 + $0x10] sm:$0xff] %vm1005, %v1645
  %2161 = vst.msk [vmem:[%s10 + $0x18] sm:$0xff] %vm1005, %v1815
  %2162 = vst.msk [vmem:[%s10 + $0x20] sm:$0xff] %vm1005, %v1985
  %2163 = vst.msk [vmem:[%s10 + $0x28] sm:$0xff] %vm1005, %v2155
  // Predicated region
  $region42: #{seq2seq_forward.1} parent=0 // pred_check
    _
  $region43: #{seq2seq_forward.1} parent=0 // pred_check_branch
    %2165 = sbr.rel (0) target = $region45
  $region44: #{seq2seq_forward.1} parent=0 // pred_region
    _
  $region45: #{seq2seq_forward.1} parent=0 // pred_fallthru
    _
  // Predicated region
  $region46: #{seq2seq_forward.1} parent=0 // pred_check
    _
  $region47: #{seq2seq_forward.1} parent=0 // pred_check_branch
    %2167 = sbr.rel (0) target = $region49
  $region48: #{seq2seq_forward.1} parent=0 // pred_region
    _
  $region49: #{seq2seq_forward.1} parent=0 // pred_fallthru
    _

</llo_original>
